<compile_context>
chip_gen: v5e
topology: v5e:2x2
jax: 0.10.0
libtpu: 0.0.40
codegen_flags: <defaults>
</compile_context>

<pallas_src>
import random

import jax
import jax.numpy as jnp
from jax.experimental import pallas as pl
from jax.experimental.pallas import tpu as pltpu

SUBLANE = 8
LANE = 128


def _round_up(x, m):
    return (x + m - 1) // m * m


# ---------------------------------------------------------------------------
# Fused encoder+decoder kernel.  grid=(1,), everything resident in VMEM, both
# time loops are in-kernel fori_loops, h/c/x live in VMEM scratch.
# ---------------------------------------------------------------------------
def seq2seq_kernel(tf_ref,                                   # SMEM (T_dec,) int32
                   src_ref, trg_ref,
                   enc_wih_ref, enc_whh_ref, enc_b_ref,
                   dec_emb_ref, dec_wih_ref, dec_whh_ref, dec_b_ref,
                   wout_ref, bout_ref,
                   logits_ref,
                   h_sc, c_sc, x_sc):
    T_src = src_ref.shape[0]
    T_dec = logits_ref.shape[0]
    Bp, Vp = logits_ref.shape[1], logits_ref.shape[2]
    Ep = x_sc.shape[1]
    Hp = h_sc.shape[1]

    # ---- hoisted loop invariants (iota / biases) ----
    iota_i = jax.lax.broadcasted_iota(jnp.int32, (Bp, Vp), 1)
    iota_f = iota_i.astype(jnp.float32)
    enc_b = enc_b_ref[...]
    dec_b = dec_b_ref[...]
    bout = bout_ref[...]

    def cell(x, h, c, wih_ref, whh_ref, b):
        # two dots on separately padded Wih/Whh (no [x,h] pack scratch)
        gates = (jnp.dot(x, wih_ref[...], preferred_element_type=jnp.float32)
                 + jnp.dot(h, whh_ref[...], preferred_element_type=jnp.float32)
                 + b)
        i = jax.nn.sigmoid(gates[:, 0 * Hp:1 * Hp])
        f = jax.nn.sigmoid(gates[:, 1 * Hp:2 * Hp])
        g = jnp.tanh(gates[:, 2 * Hp:3 * Hp])
        o = jax.nn.sigmoid(gates[:, 3 * Hp:4 * Hp])
        c_new = f * c + i * g
        h_new = o * jnp.tanh(c_new)
        return h_new, c_new

    # ---- encoder ----
    h_sc[...] = jnp.zeros_like(h_sc)
    c_sc[...] = jnp.zeros_like(c_sc)

    def enc_body(t, carry):
        h_new, c_new = cell(src_ref[t], h_sc[...], c_sc[...],
                            enc_wih_ref, enc_whh_ref, enc_b)
        h_sc[...] = h_new
        c_sc[...] = c_new
        return carry

    jax.lax.fori_loop(0, T_src, enc_body, 0)

    # ---- decoder ----
    # first input is <sos> token 0 -> its embedding row broadcast over the batch
    x_sc[...] = jnp.broadcast_to(dec_emb_ref[0:1, :], (Bp, Ep))

    def dec_body(t, carry):
        h_new, c_new = cell(x_sc[...], h_sc[...], c_sc[...],
                            dec_wih_ref, dec_whh_ref, dec_b)
        logits = jnp.dot(h_new, wout_ref[...],
                         preferred_element_type=jnp.float32) + bout
        logits_ref[t] = logits
        h_sc[...] = h_new
        c_sc[...] = c_new

        tf = tf_ref[t]

        @pl.when(tf == 1)
        def _():
            # teacher forcing: embed trg[:, t]; independent of logits/argmax
            oh = (iota_i == trg_ref[t]).astype(jnp.float32)
            x_sc[...] = jnp.dot(oh, dec_emb_ref[...],
                                preferred_element_type=jnp.float32)

        @pl.when(tf == 0)
        def _():
            # greedy argmax feedback (first-max semantics; padded vocab = -1e9)
            mx = jnp.max(logits, axis=-1, keepdims=True)
            idx = jnp.min(jnp.where(logits == mx, iota_f, float(Vp)),
                          axis=-1, keepdims=True)
            oh = (iota_f == idx).astype(jnp.float32)
            x_sc[...] = jnp.dot(oh, dec_emb_ref[...],
                                preferred_element_type=jnp.float32)

        return carry

    jax.lax.fori_loop(0, T_dec, dec_body, 0)


def run_seq2seq(tf_mask, src_emb_seq, trg_tok_seq, pp):
    T_src, Bp, Ep = src_emb_seq.shape
    T_dec = trg_tok_seq.shape[0]
    Hp = pp["enc_whh"].shape[0]
    Vp = pp["wout"].shape[1]

    def full(shape):
        return pl.BlockSpec(shape, lambda i, tf, _s=len(shape): (0,) * _s)

    return pl.pallas_call(
        seq2seq_kernel,
        out_shape=jax.ShapeDtypeStruct((T_dec, Bp, Vp), jnp.float32),
        grid_spec=pltpu.PrefetchScalarGridSpec(
            num_scalar_prefetch=1,                 # tf_mask -> SMEM
            grid=(1,),
            in_specs=[
                full(src_emb_seq.shape),           # (T_src, Bp, Ep)
                full(trg_tok_seq.shape),           # (T_dec, Bp, 1) int32
                full(pp["enc_wih"].shape),
                full(pp["enc_whh"].shape),
                full(pp["enc_b"].shape),
                full(pp["dec_emb"].shape),
                full(pp["dec_wih"].shape),
                full(pp["dec_whh"].shape),
                full(pp["dec_b"].shape),
                full(pp["wout"].shape),
                full(pp["bout"].shape),
            ],
            out_specs=full((T_dec, Bp, Vp)),
            scratch_shapes=[
                pltpu.VMEM((Bp, Hp), jnp.float32),     # h
                pltpu.VMEM((Bp, Hp), jnp.float32),     # c
                pltpu.VMEM((Bp, Ep), jnp.float32),     # current input embedding
            ],
        ),
        compiler_params=pltpu.CompilerParams(dimension_semantics=("arbitrary",)),
    )(tf_mask, src_emb_seq, trg_tok_seq,
      pp["enc_wih"], pp["enc_whh"], pp["enc_b"],
      pp["dec_emb"], pp["dec_wih"], pp["dec_whh"], pp["dec_b"],
      pp["wout"], pp["bout"])


# ---------------------------------------------------------------------------
# Parameters (logical sizes) + padding to TPU-friendly shapes
# ---------------------------------------------------------------------------
def make_params(key, src_vocab, trg_vocab, emb_dim, hidden):
    ks = jax.random.split(key, 10)
    s = 0.1
    return dict(
        enc_emb=s * jax.random.normal(ks[0], (src_vocab, emb_dim), jnp.float32),
        enc_wih=s * jax.random.normal(ks[1], (emb_dim, 4 * hidden), jnp.float32),
        enc_whh=s * jax.random.normal(ks[2], (hidden, 4 * hidden), jnp.float32),
        enc_b=s * jax.random.normal(ks[3], (1, 4 * hidden), jnp.float32),
        dec_emb=s * jax.random.normal(ks[4], (trg_vocab, emb_dim), jnp.float32),
        dec_wih=s * jax.random.normal(ks[5], (emb_dim, 4 * hidden), jnp.float32),
        dec_whh=s * jax.random.normal(ks[6], (hidden, 4 * hidden), jnp.float32),
        dec_b=s * jax.random.normal(ks[7], (1, 4 * hidden), jnp.float32),
        dec_wout=s * jax.random.normal(ks[8], (hidden, trg_vocab), jnp.float32),
        dec_bout=s * jax.random.normal(ks[9], (1, trg_vocab), jnp.float32),
    )


def pad_params(params, emb_dim, hidden, trg_vocab):
    Ep = _round_up(emb_dim, LANE)
    Hp = _round_up(hidden, LANE)
    Vp = _round_up(trg_vocab, LANE)
    E, H = emb_dim, hidden

    # Gate-blocked padding: padded gate columns get zero weight/bias, so padded
    # hidden units stay exactly 0 (i=f=o=0.5, g=0, c0=0 -> h_pad = 0).
    def pad_gate_w(w, rows, rows_p):
        out = jnp.zeros((rows_p, 4 * Hp), jnp.float32)
        for k in range(4):
            out = out.at[:rows, k * Hp:k * Hp + H].set(w[:, k * H:(k + 1) * H])
        return out

    def pad_gate_b(b):
        out = jnp.zeros((1, 4 * Hp), jnp.float32)
        for k in range(4):
            out = out.at[:, k * Hp:k * Hp + H].set(b[:, k * H:(k + 1) * H])
        return out

    enc_emb = jnp.zeros((params["enc_emb"].shape[0], Ep), jnp.float32)
    enc_emb = enc_emb.at[:, :E].set(params["enc_emb"])
    dec_emb = jnp.zeros((Vp, Ep), jnp.float32)
    dec_emb = dec_emb.at[:trg_vocab, :E].set(params["dec_emb"])
    wout = jnp.zeros((Hp, Vp), jnp.float32)
    wout = wout.at[:H, :trg_vocab].set(params["dec_wout"])
    # padded vocab columns get -1e9 so the in-kernel argmax never picks them
    bout = jnp.full((1, Vp), -1e9, jnp.float32)
    bout = bout.at[:, :trg_vocab].set(params["dec_bout"])

    return dict(
        enc_emb=enc_emb,
        enc_wih=pad_gate_w(params["enc_wih"], E, Ep),
        enc_whh=pad_gate_w(params["enc_whh"], H, Hp),
        enc_b=pad_gate_b(params["enc_b"]),
        dec_emb=dec_emb,
        dec_wih=pad_gate_w(params["dec_wih"], E, Ep),
        dec_whh=pad_gate_w(params["dec_whh"], H, Hp),
        dec_b=pad_gate_b(params["dec_b"]),
        wout=wout, bout=bout,
    )


# ---------------------------------------------------------------------------
# Forward pass (mirrors the PyTorch module's forward)
# ---------------------------------------------------------------------------
@jax.jit
def _forward_padded(tf_mask, src_emb_seq, trg_tok_seq,
                    enc_wih, enc_whh, enc_b,
                    dec_emb, dec_wih, dec_whh, dec_b, wout, bout):
    pp = dict(enc_wih=enc_wih, enc_whh=enc_whh, enc_b=enc_b,
              dec_emb=dec_emb, dec_wih=dec_wih, dec_whh=dec_whh, dec_b=dec_b,
              wout=wout, bout=bout)
    return run_seq2seq(tf_mask, src_emb_seq, trg_tok_seq, pp)


def seq2seq_forward(params_p, src, trg=None, teaching=0.5, max_len=10, trg_vocab=None):
    B = src.shape[0]
    trg_len = trg.shape[1] if trg is not None else max_len
    Bp = _round_up(max(B, SUBLANE), SUBLANE)

    # encoder input: embedding lookup (XLA) -> pad batch -> time-major (T, Bp, Ep)
    src_emb = jnp.take(params_p["enc_emb"], src.astype(jnp.int32), axis=0)
    src_emb = jnp.pad(src_emb, ((0, Bp - B), (0, 0), (0, 0)))
    src_emb_seq = jnp.transpose(src_emb, (1, 0, 2))

    # host-side teacher-forcing coin flips, same consumption order as PyTorch
    tf_flags = [1 if (trg is not None and random.random() < teaching) else 0
                for _ in range(trg_len)]
    tf_mask = jnp.asarray(tf_flags, dtype=jnp.int32)

    # target tokens as int32 ids (one-hot is built in-kernel): (T, Bp, 1)
    trg_tok = trg.astype(jnp.int32) if trg is not None else jnp.zeros((B, trg_len), jnp.int32)
    trg_tok = jnp.pad(trg_tok, ((0, Bp - B), (0, 0)))
    trg_tok_seq = jnp.transpose(trg_tok, (1, 0))[:, :, None]

    logits_seq = _forward_padded(tf_mask, src_emb_seq, trg_tok_seq,
                                 params_p["enc_wih"], params_p["enc_whh"],
                                 params_p["enc_b"], params_p["dec_emb"],
                                 params_p["dec_wih"], params_p["dec_whh"],
                                 params_p["dec_b"], params_p["wout"],
                                 params_p["bout"])
    # (T, Bp, Vp) -> (batch, trg_vocab, trg_len)
    return jnp.transpose(logits_seq[:, :B, :trg_vocab], (1, 2, 0))


# ---------------------------------------------------------------------------
# Pure-JAX reference (same math, logical sizes) for a correctness check
# ---------------------------------------------------------------------------
def reference_forward(params, src, trg=None, teaching=0.5, max_len=10):
    B = src.shape[0]
    H = params["enc_whh"].shape[0]
    trg_len = trg.shape[1] if trg is not None else max_len

    def cell(x, h, c, wih, whh, b):
        gates = x @ wih + h @ whh + b
        i = jax.nn.sigmoid(gates[:, :H])
        f = jax.nn.sigmoid(gates[:, H:2 * H])
        g = jnp.tanh(gates[:, 2 * H:3 * H])
        o = jax.nn.sigmoid(gates[:, 3 * H:4 * H])
        c = f * c + i * g
        return o * jnp.tanh(c), c

    h = jnp.zeros((B, H), jnp.float32)
    c = jnp.zeros((B, H), jnp.float32)
    src_emb = jnp.take(params["enc_emb"], src, axis=0)
    for t in range(src.shape[1]):
        h, c = cell(src_emb[:, t], h, c, params["enc_wih"], params["enc_whh"], params["enc_b"])
    inp = jnp.zeros((B,), jnp.int32)
    outs = []
    for t in range(trg_len):
        x = jnp.take(params["dec_emb"], inp, axis=0)
        h, c = cell(x, h, c, params["dec_wih"], params["dec_whh"], params["dec_b"])
        logits = h @ params["dec_wout"] + params["dec_bout"]
        outs.append(logits)
        if trg is not None and random.random() < teaching:
            inp = trg[:, t].astype(jnp.int32)
        else:
            inp = jnp.argmax(logits, axis=1).astype(jnp.int32)
    return jnp.stack(outs, axis=2)


# ---------------------------------------------------------------------------
if __name__ == "__main__":
    B = 2
    SRC_LEN = 8
    TRG_LEN = 8
    EMB = 32
    HID = 32
    SRC_VOCAB = 16
    TRG_VOCAB = 16

    key = jax.random.PRNGKey(0)
    pkey, skey, tkey = jax.random.split(key, 3)
    params = make_params(pkey, SRC_VOCAB, TRG_VOCAB, EMB, HID)
    params_p = pad_params(params, EMB, HID, TRG_VOCAB)

    src = jax.random.randint(skey, (B, SRC_LEN), 0, SRC_VOCAB, dtype=jnp.int32)
    trg = jax.random.randint(tkey, (B, TRG_LEN), 0, TRG_VOCAB, dtype=jnp.int32)

    # Pallas forward (deterministic teacher-forcing coin flips, host-side)
    random.seed(0)
    outputs = seq2seq_forward(params_p, src, trg, teaching=0.5, max_len=10,
                              trg_vocab=TRG_VOCAB)
    outputs = jax.block_until_ready(outputs)

    assert outputs.shape == (B, TRG_VOCAB, TRG_LEN)
    assert bool(jnp.all(jnp.isfinite(outputs)))

    # Reference with the same RNG stream
    random.seed(0)
    ref = reference_forward(params, src, trg, teaching=0.5, max_len=10)
    assert bool(jnp.allclose(outputs, ref, atol=1e-3, rtol=1e-3))

    print("KERNEL_OK")
</pallas_src>

<mosaic_0001>
module attributes {stable_mosaic.version = 11 : i64} {
  func.func @seq2seq_kernel(%arg0: i32, %arg1: memref<8xi32, #tpu.memory_space<smem>>, %arg2: memref<8x8x128xf32, #tpu.memory_space<vmem>>, %arg3: memref<8x8x1xi32, #tpu.memory_space<vmem>>, %arg4: memref<128x512xf32, #tpu.memory_space<vmem>>, %arg5: memref<128x512xf32, #tpu.memory_space<vmem>>, %arg6: memref<1x512xf32, #tpu.memory_space<vmem>>, %arg7: memref<128x128xf32, #tpu.memory_space<vmem>>, %arg8: memref<128x512xf32, #tpu.memory_space<vmem>>, %arg9: memref<128x512xf32, #tpu.memory_space<vmem>>, %arg10: memref<1x512xf32, #tpu.memory_space<vmem>>, %arg11: memref<128x128xf32, #tpu.memory_space<vmem>>, %arg12: memref<1x128xf32, #tpu.memory_space<vmem>>, %arg13: memref<8x8x128xf32, #tpu.memory_space<vmem>>, %arg14: memref<8x128xf32, #tpu.memory_space<vmem>>, %arg15: memref<8x128xf32, #tpu.memory_space<vmem>>, %arg16: memref<8x128xf32, #tpu.memory_space<vmem>>) attributes {dimension_semantics = [#tpu.dimension_semantics<arbitrary>], iteration_bounds = array<i64: 1>, scalar_prefetch = 1 : i64, scratch_operands = 3 : i64, tpu.core_type = #tpu.core_type<tc>, window_params = [{pipeline_mode = #tpu.pipeline_mode<synchronous>, transform_indices = @transform_0, window_bounds = array<i64: 8, 8, 128>}, {pipeline_mode = #tpu.pipeline_mode<synchronous>, transform_indices = @transform_1, window_bounds = array<i64: 8, 8, 1>}, {pipeline_mode = #tpu.pipeline_mode<synchronous>, transform_indices = @transform_2, window_bounds = array<i64: 128, 512>}, {pipeline_mode = #tpu.pipeline_mode<synchronous>, transform_indices = @transform_3, window_bounds = array<i64: 128, 512>}, {pipeline_mode = #tpu.pipeline_mode<synchronous>, transform_indices = @transform_4, window_bounds = array<i64: 1, 512>}, {pipeline_mode = #tpu.pipeline_mode<synchronous>, transform_indices = @transform_5, window_bounds = array<i64: 128, 128>}, {pipeline_mode = #tpu.pipeline_mode<synchronous>, transform_indices = @transform_6, window_bounds = array<i64: 128, 512>}, {pipeline_mode = #tpu.pipeline_mode<synchronous>, transform_indices = @transform_7, window_bounds = array<i64: 128, 512>}, {pipeline_mode = #tpu.pipeline_mode<synchronous>, transform_indices = @transform_8, window_bounds = array<i64: 1, 512>}, {pipeline_mode = #tpu.pipeline_mode<synchronous>, transform_indices = @transform_9, window_bounds = array<i64: 128, 128>}, {pipeline_mode = #tpu.pipeline_mode<synchronous>, transform_indices = @transform_10, window_bounds = array<i64: 1, 128>}, {pipeline_mode = #tpu.pipeline_mode<synchronous>, transform_indices = @transform_11, window_bounds = array<i64: 8, 8, 128>}]} {
    %0 = tpu.iota {dimensions = array<i32: 1>} : vector<8x128xi32>
    %1 = arith.sitofp %0 : vector<8x128xi32> to vector<8x128xf32>
    %c0 = arith.constant 0 : index
    %c0_0 = arith.constant 0 : index
    %2 = vector.load %arg6[%c0, %c0_0] : memref<1x512xf32, #tpu.memory_space<vmem>>, vector<1x512xf32>
    %c0_1 = arith.constant 0 : index
    %c0_2 = arith.constant 0 : index
    %3 = vector.load %arg10[%c0_1, %c0_2] : memref<1x512xf32, #tpu.memory_space<vmem>>, vector<1x512xf32>
    %c0_3 = arith.constant 0 : index
    %c0_4 = arith.constant 0 : index
    %4 = vector.load %arg12[%c0_3, %c0_4] : memref<1x128xf32, #tpu.memory_space<vmem>>, vector<1x128xf32>
    %cst = arith.constant 0.000000e+00 : f32
    %5 = vector.broadcast %cst : f32 to vector<8x128xf32>
    %c0_5 = arith.constant 0 : index
    %c0_6 = arith.constant 0 : index
    %6 = vector.load %arg14[%c0_5, %c0_6] : memref<8x128xf32, #tpu.memory_space<vmem>>, vector<8x128xf32>
    tpu.vector_store %arg14[%c0_5, %c0_6], %5 {strides = array<i32>} : memref<8x128xf32, #tpu.memory_space<vmem>>, vector<8x128xf32>,
    %cst_7 = arith.constant 0.000000e+00 : f32
    %7 = vector.broadcast %cst_7 : f32 to vector<8x128xf32>
    %c0_8 = arith.constant 0 : index
    %c0_9 = arith.constant 0 : index
    %8 = vector.load %arg15[%c0_8, %c0_9] : memref<8x128xf32, #tpu.memory_space<vmem>>, vector<8x128xf32>
    tpu.vector_store %arg15[%c0_8, %c0_9], %7 {strides = array<i32>} : memref<8x128xf32, #tpu.memory_space<vmem>>, vector<8x128xf32>,
    %c0_i32 = arith.constant 0 : i32
    %c8_i32 = arith.constant 8 : i32
    %9 = arith.addi %c0_i32, %c8_i32 : i32
    %c1_i32 = arith.constant 1 : i32
    scf.for %arg17 = %c0_i32 to %9 step %c1_i32  : i32 {
      %15 = arith.index_cast %arg17 : i32 to index
      %c0_19 = arith.constant 0 : index
      %c0_20 = arith.constant 0 : index
      %16 = vector.load %arg2[%15, %c0_19, %c0_20] : memref<8x8x128xf32, #tpu.memory_space<vmem>>, vector<1x8x128xf32>
      %17 = vector.shape_cast %16 : vector<1x8x128xf32> to vector<8x128xf32>
      %c0_21 = arith.constant 0 : index
      %c0_22 = arith.constant 0 : index
      %18 = vector.load %arg14[%c0_21, %c0_22] : memref<8x128xf32, #tpu.memory_space<vmem>>, vector<8x128xf32>
      %c0_23 = arith.constant 0 : index
      %c0_24 = arith.constant 0 : index
      %19 = vector.load %arg15[%c0_23, %c0_24] : memref<8x128xf32, #tpu.memory_space<vmem>>, vector<8x128xf32>
      %c0_25 = arith.constant 0 : index
      %c0_26 = arith.constant 0 : index
      %20 = vector.load %arg4[%c0_25, %c0_26] : memref<128x512xf32, #tpu.memory_space<vmem>>, vector<128x512xf32>
      %cst_27 = arith.constant dense<0.000000e+00> : vector<8x512xf32>
      %21 = tpu.matmul %17, %20, %cst_27 {dimension_numbers = #tpu.dot_dimension_numbers<[1], [0], [0], [1], [0, 0, 1, 1], [], []>} : vector<8x128xf32>, vector<128x512xf32>, vector<8x512xf32> -> vector<8x512xf32>
      %c0_28 = arith.constant 0 : index
      %c0_29 = arith.constant 0 : index
      %22 = vector.load %arg5[%c0_28, %c0_29] : memref<128x512xf32, #tpu.memory_space<vmem>>, vector<128x512xf32>
      %cst_30 = arith.constant dense<0.000000e+00> : vector<8x512xf32>
      %23 = tpu.matmul %18, %22, %cst_30 {dimension_numbers = #tpu.dot_dimension_numbers<[1], [0], [0], [1], [0, 0, 1, 1], [], []>} : vector<8x128xf32>, vector<128x512xf32>, vector<8x512xf32> -> vector<8x512xf32>
      %24 = arith.addf %21, %23 : vector<8x512xf32>
      %25 = vector.broadcast %2 : vector<1x512xf32> to vector<8x512xf32>
      %26 = arith.addf %24, %25 : vector<8x512xf32>
      %27 = vector.extract_strided_slice %26 {offsets = [0, 0], sizes = [8, 128], strides = [1, 1]} : vector<8x512xf32> to vector<8x128xf32>
      %28 = arith.negf %27 : vector<8x128xf32>
      %29 = math.exp %28 : vector<8x128xf32>
      %cst_31 = arith.constant 1.000000e+00 : f32
      %30 = vector.broadcast %cst_31 : f32 to vector<8x128xf32>
      %31 = arith.addf %30, %29 : vector<8x128xf32>
      %32 = arith.divf %30, %31 : vector<8x128xf32>
      %33 = vector.extract_strided_slice %26 {offsets = [0, 128], sizes = [8, 128], strides = [1, 1]} : vector<8x512xf32> to vector<8x128xf32>
      %34 = arith.negf %33 : vector<8x128xf32>
      %35 = math.exp %34 : vector<8x128xf32>
      %cst_32 = arith.constant 1.000000e+00 : f32
      %36 = vector.broadcast %cst_32 : f32 to vector<8x128xf32>
      %37 = arith.addf %36, %35 : vector<8x128xf32>
      %38 = arith.divf %36, %37 : vector<8x128xf32>
      %39 = vector.extract_strided_slice %26 {offsets = [0, 256], sizes = [8, 128], strides = [1, 1]} : vector<8x512xf32> to vector<8x128xf32>
      %40 = math.tanh %39 : vector<8x128xf32>
      %41 = vector.extract_strided_slice %26 {offsets = [0, 384], sizes = [8, 128], strides = [1, 1]} : vector<8x512xf32> to vector<8x128xf32>
      %42 = arith.negf %41 : vector<8x128xf32>
      %43 = math.exp %42 : vector<8x128xf32>
      %cst_33 = arith.constant 1.000000e+00 : f32
      %44 = vector.broadcast %cst_33 : f32 to vector<8x128xf32>
      %45 = arith.addf %44, %43 : vector<8x128xf32>
      %46 = arith.divf %44, %45 : vector<8x128xf32>
      %47 = arith.mulf %38, %19 : vector<8x128xf32>
      %48 = arith.mulf %32, %40 : vector<8x128xf32>
      %49 = arith.addf %47, %48 : vector<8x128xf32>
      %50 = math.tanh %49 : vector<8x128xf32>
      %51 = arith.mulf %46, %50 : vector<8x128xf32>
      %c0_34 = arith.constant 0 : index
      %c0_35 = arith.constant 0 : index
      %52 = vector.load %arg14[%c0_34, %c0_35] : memref<8x128xf32, #tpu.memory_space<vmem>>, vector<8x128xf32>
      tpu.vector_store %arg14[%c0_34, %c0_35], %51 {strides = array<i32>} : memref<8x128xf32, #tpu.memory_space<vmem>>, vector<8x128xf32>,
      %c0_36 = arith.constant 0 : index
      %c0_37 = arith.constant 0 : index
      %53 = vector.load %arg15[%c0_36, %c0_37] : memref<8x128xf32, #tpu.memory_space<vmem>>, vector<8x128xf32>
      tpu.vector_store %arg15[%c0_36, %c0_37], %49 {strides = array<i32>} : memref<8x128xf32, #tpu.memory_space<vmem>>, vector<8x128xf32>,
    }
    %c8_i32_10 = arith.constant 8 : i32
    %c0_11 = arith.constant 0 : index
    %c0_12 = arith.constant 0 : index
    %10 = vector.load %arg7[%c0_11, %c0_12] : memref<128x128xf32, #tpu.memory_space<vmem>>, vector<1x128xf32>
    %11 = vector.shape_cast %10 : vector<1x128xf32> to vector<1x128xf32>
    %12 = vector.broadcast %11 : vector<1x128xf32> to vector<8x128xf32>
    %c0_13 = arith.constant 0 : index
    %c0_14 = arith.constant 0 : index
    %13 = vector.load %arg16[%c0_13, %c0_14] : memref<8x128xf32, #tpu.memory_space<vmem>>, vector<8x128xf32>
    tpu.vector_store %arg16[%c0_13, %c0_14], %12 {strides = array<i32>} : memref<8x128xf32, #tpu.memory_space<vmem>>, vector<8x128xf32>,
    %c0_i32_15 = arith.constant 0 : i32
    %c8_i32_16 = arith.constant 8 : i32
    %14 = arith.addi %c0_i32_15, %c8_i32_16 : i32
    %c1_i32_17 = arith.constant 1 : i32
    scf.for %arg17 = %c0_i32_15 to %14 step %c1_i32_17  : i32 {
      %c0_19 = arith.constant 0 : index
      %c0_20 = arith.constant 0 : index
      %15 = vector.load %arg16[%c0_19, %c0_20] : memref<8x128xf32, #tpu.memory_space<vmem>>, vector<8x128xf32>
      %c0_21 = arith.constant 0 : index
      %c0_22 = arith.constant 0 : index
      %16 = vector.load %arg14[%c0_21, %c0_22] : memref<8x128xf32, #tpu.memory_space<vmem>>, vector<8x128xf32>
      %c0_23 = arith.constant 0 : index
      %c0_24 = arith.constant 0 : index
      %17 = vector.load %arg15[%c0_23, %c0_24] : memref<8x128xf32, #tpu.memory_space<vmem>>, vector<8x128xf32>
      %c0_25 = arith.constant 0 : index
      %c0_26 = arith.constant 0 : index
      %18 = vector.load %arg8[%c0_25, %c0_26] : memref<128x512xf32, #tpu.memory_space<vmem>>, vector<128x512xf32>
      %cst_27 = arith.constant dense<0.000000e+00> : vector<8x512xf32>
      %19 = tpu.matmul %15, %18, %cst_27 {dimension_numbers = #tpu.dot_dimension_numbers<[1], [0], [0], [1], [0, 0, 1, 1], [], []>} : vector<8x128xf32>, vector<128x512xf32>, vector<8x512xf32> -> vector<8x512xf32>
      %c0_28 = arith.constant 0 : index
      %c0_29 = arith.constant 0 : index
      %20 = vector.load %arg9[%c0_28, %c0_29] : memref<128x512xf32, #tpu.memory_space<vmem>>, vector<128x512xf32>
      %cst_30 = arith.constant dense<0.000000e+00> : vector<8x512xf32>
      %21 = tpu.matmul %16, %20, %cst_30 {dimension_numbers = #tpu.dot_dimension_numbers<[1], [0], [0], [1], [0, 0, 1, 1], [], []>} : vector<8x128xf32>, vector<128x512xf32>, vector<8x512xf32> -> vector<8x512xf32>
      %22 = arith.addf %19, %21 : vector<8x512xf32>
      %23 = vector.broadcast %3 : vector<1x512xf32> to vector<8x512xf32>
      %24 = arith.addf %22, %23 : vector<8x512xf32>
      %25 = vector.extract_strided_slice %24 {offsets = [0, 0], sizes = [8, 128], strides = [1, 1]} : vector<8x512xf32> to vector<8x128xf32>
      %26 = arith.negf %25 : vector<8x128xf32>
      %27 = math.exp %26 : vector<8x128xf32>
      %cst_31 = arith.constant 1.000000e+00 : f32
      %28 = vector.broadcast %cst_31 : f32 to vector<8x128xf32>
      %29 = arith.addf %28, %27 : vector<8x128xf32>
      %30 = arith.divf %28, %29 : vector<8x128xf32>
      %31 = vector.extract_strided_slice %24 {offsets = [0, 128], sizes = [8, 128], strides = [1, 1]} : vector<8x512xf32> to vector<8x128xf32>
      %32 = arith.negf %31 : vector<8x128xf32>
      %33 = math.exp %32 : vector<8x128xf32>
      %cst_32 = arith.constant 1.000000e+00 : f32
      %34 = vector.broadcast %cst_32 : f32 to vector<8x128xf32>
      %35 = arith.addf %34, %33 : vector<8x128xf32>
      %36 = arith.divf %34, %35 : vector<8x128xf32>
      %37 = vector.extract_strided_slice %24 {offsets = [0, 256], sizes = [8, 128], strides = [1, 1]} : vector<8x512xf32> to vector<8x128xf32>
      %38 = math.tanh %37 : vector<8x128xf32>
      %39 = vector.extract_strided_slice %24 {offsets = [0, 384], sizes = [8, 128], strides = [1, 1]} : vector<8x512xf32> to vector<8x128xf32>
      %40 = arith.negf %39 : vector<8x128xf32>
      %41 = math.exp %40 : vector<8x128xf32>
      %cst_33 = arith.constant 1.000000e+00 : f32
      %42 = vector.broadcast %cst_33 : f32 to vector<8x128xf32>
      %43 = arith.addf %42, %41 : vector<8x128xf32>
      %44 = arith.divf %42, %43 : vector<8x128xf32>
      %45 = arith.mulf %36, %17 : vector<8x128xf32>
      %46 = arith.mulf %30, %38 : vector<8x128xf32>
      %47 = arith.addf %45, %46 : vector<8x128xf32>
      %48 = math.tanh %47 : vector<8x128xf32>
      %49 = arith.mulf %44, %48 : vector<8x128xf32>
      %c0_34 = arith.constant 0 : index
      %c0_35 = arith.constant 0 : index
      %50 = vector.load %arg11[%c0_34, %c0_35] : memref<128x128xf32, #tpu.memory_space<vmem>>, vector<128x128xf32>
      %cst_36 = arith.constant dense<0.000000e+00> : vector<8x128xf32>
      %51 = tpu.matmul %49, %50, %cst_36 {dimension_numbers = #tpu.dot_dimension_numbers<[1], [0], [0], [1], [0, 0, 1, 1], [], []>} : vector<8x128xf32>, vector<128x128xf32>, vector<8x128xf32> -> vector<8x128xf32>
      %52 = vector.broadcast %4 : vector<1x128xf32> to vector<8x128xf32>
      %53 = arith.addf %51, %52 : vector<8x128xf32>
      %54 = arith.index_cast %arg17 : i32 to index
      %c0_37 = arith.constant 0 : index
      %c0_38 = arith.constant 0 : index
      %55 = vector.load %arg13[%54, %c0_37, %c0_38] : memref<8x8x128xf32, #tpu.memory_space<vmem>>, vector<1x8x128xf32>
      %56 = vector.shape_cast %55 : vector<1x8x128xf32> to vector<8x128xf32>
      %57 = vector.shape_cast %53 : vector<8x128xf32> to vector<1x8x128xf32>
      tpu.vector_store %arg13[%54, %c0_37, %c0_38], %57 {strides = array<i32>} : memref<8x8x128xf32, #tpu.memory_space<vmem>>, vector<1x8x128xf32>,
      %c0_39 = arith.constant 0 : index
      %c0_40 = arith.constant 0 : index
      %58 = vector.load %arg14[%c0_39, %c0_40] : memref<8x128xf32, #tpu.memory_space<vmem>>, vector<8x128xf32>
      tpu.vector_store %arg14[%c0_39, %c0_40], %49 {strides = array<i32>} : memref<8x128xf32, #tpu.memory_space<vmem>>, vector<8x128xf32>,
      %c0_41 = arith.constant 0 : index
      %c0_42 = arith.constant 0 : index
      %59 = vector.load %arg15[%c0_41, %c0_42] : memref<8x128xf32, #tpu.memory_space<vmem>>, vector<8x128xf32>
      tpu.vector_store %arg15[%c0_41, %c0_42], %47 {strides = array<i32>} : memref<8x128xf32, #tpu.memory_space<vmem>>, vector<8x128xf32>,
      %60 = arith.index_cast %arg17 : i32 to index
      %61 = memref.load %arg1[%60] : memref<8xi32, #tpu.memory_space<smem>>
      %c1_i32_43 = arith.constant 1 : i32
      %62 = arith.cmpi eq, %61, %c1_i32_43 : i32
      %63 = arith.extui %62 : i1 to i32
      %c0_i32_44 = arith.constant 0 : i32
      %64 = arith.cmpi ne, %63, %c0_i32_44 : i32
      scf.if %64 {
        %68 = arith.index_cast %arg17 : i32 to index
        %c0_47 = arith.constant 0 : index
        %c0_48 = arith.constant 0 : index
        %69 = vector.load %arg3[%68, %c0_47, %c0_48] : memref<8x8x1xi32, #tpu.memory_space<vmem>>, vector<1x8x1xi32>
        %70 = vector.shape_cast %69 : vector<1x8x1xi32> to vector<8x1xi32>
        %71 = vector.broadcast %70 : vector<8x1xi32> to vector<8x128xi32>
        %72 = arith.cmpi eq, %0, %71 : vector<8x128xi32>
        %73 = arith.extui %72 : vector<8x128xi1> to vector<8x128xi32>
        %74 = arith.sitofp %73 : vector<8x128xi32> to vector<8x128xf32>
        %c0_49 = arith.constant 0 : index
        %c0_50 = arith.constant 0 : index
        %75 = vector.load %arg7[%c0_49, %c0_50] : memref<128x128xf32, #tpu.memory_space<vmem>>, vector<128x128xf32>
        %cst_51 = arith.constant dense<0.000000e+00> : vector<8x128xf32>
        %76 = tpu.matmul %74, %75, %cst_51 {dimension_numbers = #tpu.dot_dimension_numbers<[1], [0], [0], [1], [0, 0, 1, 1], [], []>} : vector<8x128xf32>, vector<128x128xf32>, vector<8x128xf32> -> vector<8x128xf32>
        %c0_52 = arith.constant 0 : index
        %c0_53 = arith.constant 0 : index
        %77 = vector.load %arg16[%c0_52, %c0_53] : memref<8x128xf32, #tpu.memory_space<vmem>>, vector<8x128xf32>
        tpu.vector_store %arg16[%c0_52, %c0_53], %76 {strides = array<i32>} : memref<8x128xf32, #tpu.memory_space<vmem>>, vector<8x128xf32>,
      } else {
      }
      %c0_i32_45 = arith.constant 0 : i32
      %65 = arith.cmpi eq, %61, %c0_i32_45 : i32
      %66 = arith.extui %65 : i1 to i32
      %c0_i32_46 = arith.constant 0 : i32
      %67 = arith.cmpi ne, %66, %c0_i32_46 : i32
      scf.if %67 {
        %cst_47 = arith.constant dense<0xFF800000> : vector<8xf32>
        %68 = vector.multi_reduction <maximumf>, %53, %cst_47 [1] : vector<8x128xf32> to vector<8xf32>
        %69 = vector.shape_cast %68 : vector<8xf32> to vector<8x1xf32>
        %70 = vector.broadcast %69 : vector<8x1xf32> to vector<8x128xf32>
        %71 = arith.cmpf oeq, %53, %70 : vector<8x128xf32>
        %cst_48 = arith.constant 1.280000e+02 : f32
        %72 = vector.broadcast %cst_48 : f32 to vector<8x128xf32>
        %73 = arith.select %71, %1, %72 : vector<8x128xi1>, vector<8x128xf32>
        %cst_49 = arith.constant dense<0x7F800000> : vector<8xf32>
        %74 = vector.multi_reduction <minimumf>, %73, %cst_49 [1] : vector<8x128xf32> to vector<8xf32>
        %75 = vector.shape_cast %74 : vector<8xf32> to vector<8x1xf32>
        %76 = vector.broadcast %75 : vector<8x1xf32> to vector<8x128xf32>
        %77 = arith.cmpf oeq, %1, %76 : vector<8x128xf32>
        %78 = arith.extui %77 : vector<8x128xi1> to vector<8x128xi32>
        %79 = arith.sitofp %78 : vector<8x128xi32> to vector<8x128xf32>
        %c0_50 = arith.constant 0 : index
        %c0_51 = arith.constant 0 : index
        %80 = vector.load %arg7[%c0_50, %c0_51] : memref<128x128xf32, #tpu.memory_space<vmem>>, vector<128x128xf32>
        %cst_52 = arith.constant dense<0.000000e+00> : vector<8x128xf32>
        %81 = tpu.matmul %79, %80, %cst_52 {dimension_numbers = #tpu.dot_dimension_numbers<[1], [0], [0], [1], [0, 0, 1, 1], [], []>} : vector<8x128xf32>, vector<128x128xf32>, vector<8x128xf32> -> vector<8x128xf32>
        %c0_53 = arith.constant 0 : index
        %c0_54 = arith.constant 0 : index
        %82 = vector.load %arg16[%c0_53, %c0_54] : memref<8x128xf32, #tpu.memory_space<vmem>>, vector<8x128xf32>
        tpu.vector_store %arg16[%c0_53, %c0_54], %81 {strides = array<i32>} : memref<8x128xf32, #tpu.memory_space<vmem>>, vector<8x128xf32>,
      } else {
      }
    }
    %c8_i32_18 = arith.constant 8 : i32
    return
  }
  func.func @transform_0(%arg0: i32, %arg1: memref<8xi32, #tpu.memory_space<smem>>) -> (i32, i32, i32) {
    %c0_i32 = arith.constant 0 : i32
    %c0_i32_0 = arith.constant 0 : i32
    %c0_i32_1 = arith.constant 0 : i32
    %c0_i32_2 = arith.constant 0 : i32
    return %c0_i32, %c0_i32_0, %c0_i32_1 : i32, i32, i32
  }
  func.func @transform_1(%arg0: i32, %arg1: memref<8xi32, #tpu.memory_space<smem>>) -> (i32, i32, i32) {
    %c0_i32 = arith.constant 0 : i32
    %c0_i32_0 = arith.constant 0 : i32
    %c0_i32_1 = arith.constant 0 : i32
    %c0_i32_2 = arith.constant 0 : i32
    return %c0_i32, %c0_i32_0, %c0_i32_1 : i32, i32, i32
  }
  func.func @transform_2(%arg0: i32, %arg1: memref<8xi32, #tpu.memory_space<smem>>) -> (i32, i32) {
    %c0_i32 = arith.constant 0 : i32
    %c0_i32_0 = arith.constant 0 : i32
    %c0_i32_1 = arith.constant 0 : i32
    return %c0_i32, %c0_i32_0 : i32, i32
  }
  func.func @transform_3(%arg0: i32, %arg1: memref<8xi32, #tpu.memory_space<smem>>) -> (i32, i32) {
    %c0_i32 = arith.constant 0 : i32
    %c0_i32_0 = arith.constant 0 : i32
    %c0_i32_1 = arith.constant 0 : i32
    return %c0_i32, %c0_i32_0 : i32, i32
  }
  func.func @transform_4(%arg0: i32, %arg1: memref<8xi32, #tpu.memory_space<smem>>) -> (i32, i32) {
    %c0_i32 = arith.constant 0 : i32
    %c0_i32_0 = arith.constant 0 : i32
    %c0_i32_1 = arith.constant 0 : i32
    return %c0_i32, %c0_i32_0 : i32, i32
  }
  func.func @transform_5(%arg0: i32, %arg1: memref<8xi32, #tpu.memory_space<smem>>) -> (i32, i32) {
    %c0_i32 = arith.constant 0 : i32
    %c0_i32_0 = arith.constant 0 : i32
    %c0_i32_1 = arith.constant 0 : i32
    return %c0_i32, %c0_i32_0 : i32, i32
  }
  func.func @transform_6(%arg0: i32, %arg1: memref<8xi32, #tpu.memory_space<smem>>) -> (i32, i32) {
    %c0_i32 = arith.constant 0 : i32
    %c0_i32_0 = arith.constant 0 : i32
    %c0_i32_1 = arith.constant 0 : i32
    return %c0_i32, %c0_i32_0 : i32, i32
  }
  func.func @transform_7(%arg0: i32, %arg1: memref<8xi32, #tpu.memory_space<smem>>) -> (i32, i32) {
    %c0_i32 = arith.constant 0 : i32
    %c0_i32_0 = arith.constant 0 : i32
    %c0_i32_1 = arith.constant 0 : i32
    return %c0_i32, %c0_i32_0 : i32, i32
  }
  func.func @transform_8(%arg0: i32, %arg1: memref<8xi32, #tpu.memory_space<smem>>) -> (i32, i32) {
    %c0_i32 = arith.constant 0 : i32
    %c0_i32_0 = arith.constant 0 : i32
    %c0_i32_1 = arith.constant 0 : i32
    return %c0_i32, %c0_i32_0 : i32, i32
  }
  func.func @transform_9(%arg0: i32, %arg1: memref<8xi32, #tpu.memory_space<smem>>) -> (i32, i32) {
    %c0_i32 = arith.constant 0 : i32
    %c0_i32_0 = arith.constant 0 : i32
    %c0_i32_1 = arith.constant 0 : i32
    return %c0_i32, %c0_i32_0 : i32, i32
  }
  func.func @transform_10(%arg0: i32, %arg1: memref<8xi32, #tpu.memory_space<smem>>) -> (i32, i32) {
    %c0_i32 = arith.constant 0 : i32
    %c0_i32_0 = arith.constant 0 : i32
    %c0_i32_1 = arith.constant 0 : i32
    return %c0_i32, %c0_i32_0 : i32, i32
  }
  func.func @transform_11(%arg0: i32, %arg1: memref<8xi32, #tpu.memory_space<smem>>) -> (i32, i32, i32) {
    %c0_i32 = arith.constant 0 : i32
    %c0_i32_0 = arith.constant 0 : i32
    %c0_i32_1 = arith.constant 0 : i32
    %c0_i32_2 = arith.constant 0 : i32
    return %c0_i32, %c0_i32_0, %c0_i32_1 : i32, i32, i32
  }
}

</mosaic_0001>

<llo_original>
// kernel: _forward_padded.1
$region0: #{_forward_padded.1}
  #allocation0 [shape = 'u32[]', space=smem, size = 0x4, offset = 0x4, fixed_abs, tag = 'smem constant byte address 0x4 - core index']
  #allocation1 [shape = 'u32[72,128]{1,0:T(1,128)}', space=vmem, size = 0x9000, scoped, tag = 'internal scratch']
  #allocation2 [shape = 'f32[8,128]{1,0:T(8,128)}', space=vmem, size = 0x1000, scoped, tag = 'scratch operand']
  #allocation3 [shape = 'f32[8,128]{1,0:T(8,128)}', space=vmem, size = 0x1000, scoped, tag = 'scratch operand']
  #allocation4 [shape = 'f32[8,128]{1,0:T(8,128)}', space=vmem, size = 0x1000, scoped, tag = 'scratch operand']
  #allocation5 [shape = 's32[1]{0}', space=sflag, size = 0x4, scoped, tag = 'scoped memory for _forward_padded.1']
  #allocation6 [shape = 'u8[512]{0}', space=smem, size = 0x200, scoped, tag = 'prefetched SMEM operand 0']
  %s0 = inlined_call_operand.hbm [shape: s32[8], index: 0, kind: input, shape index: {}]
  %s1 = inlined_call_operand.vmem [shape: f32[8,8,128], index: 1, kind: input, shape index: {}]
  %s2 = inlined_call_operand.vmem [shape: s32[8,8,1], index: 2, kind: input, shape index: {}]
  %s3 = inlined_call_operand.hbm [shape: f32[128,512], index: 3, kind: input, shape index: {}]
  %s4 = inlined_call_operand.hbm [shape: f32[128,512], index: 4, kind: input, shape index: {}]
  %s5 = inlined_call_operand.vmem [shape: f32[1,512], index: 5, kind: input, shape index: {}]
  %s6 = inlined_call_operand.hbm [shape: f32[128,128], index: 6, kind: input, shape index: {}]
  %s7 = inlined_call_operand.hbm [shape: f32[128,512], index: 7, kind: input, shape index: {}]
  %s8 = inlined_call_operand.hbm [shape: f32[128,512], index: 8, kind: input, shape index: {}]
  %s9 = inlined_call_operand.vmem [shape: f32[1,512], index: 9, kind: input, shape index: {}]
  %s10 = inlined_call_operand.hbm [shape: f32[128,128], index: 10, kind: input, shape index: {}]
  %s11 = inlined_call_operand.vmem [shape: f32[1,128], index: 11, kind: input, shape index: {}]
  %s12 = inlined_call_operand.hbm [shape: f32[8,8,128], index: 12, kind: output, shape index: {}]
  %s13 = sld [smem:[#allocation0]]
  $region100: #{_forward_padded.1} parent=0
    _
  %s15 = ssub.s32 1, %s13
  %s16 = scalar_select 0, %s15, %s13
  %s18 = sshll.u32 %s0, 4
  %s19 = int_to_ptr.hbm [resolvable:$true] %s18
  %21 = dma.hbm_to_smem %s19, 16, [#allocation6], [#allocation5]
  %23 = dma.done [#allocation5], 16
  %24 = sfence
  $region1: #{_forward_padded.1} parent=0
    #allocation7 [shape = 'u8[262144]{0}', space=vmem, size = 0x40000, scoped, tag = 'input window, operand 3, single buffered']
    #allocation8 [shape = 's32[1]{0}', space=sflag, size = 0x4, scoped, tag = 'scoped memory for _forward_padded.1']
    #allocation9 [shape = 's32[1]{0}', space=sflag, size = 0x4, scoped, tag = 'scoped memory for _forward_padded.1']
    #allocation10 [shape = 'u8[262144]{0}', space=vmem, size = 0x40000, scoped, tag = 'input window, operand 4, single buffered']
    #allocation11 [shape = 's32[1]{0}', space=sflag, size = 0x4, scoped, tag = 'scoped memory for _forward_padded.1']
    #allocation12 [shape = 'u8[65536]{0}', space=vmem, size = 0x10000, scoped, tag = 'input window, operand 6, single buffered']
    #allocation13 [shape = 'u8[262144]{0}', space=vmem, size = 0x40000, scoped, tag = 'input window, operand 7, single buffered']
    #allocation14 [shape = 's32[1]{0}', space=sflag, size = 0x4, scoped, tag = 'scoped memory for _forward_padded.1']
    #allocation15 [shape = 'u8[262144]{0}', space=vmem, size = 0x40000, scoped, tag = 'input window, operand 8, single buffered']
    #allocation16 [shape = 'u8[65536]{0}', space=vmem, size = 0x10000, scoped, tag = 'input window, operand 10, single buffered']
    #allocation17 [shape = 's32[1]{0}', space=sflag, size = 0x4, scoped, tag = 'scoped memory for _forward_padded.1']
    #allocation18 [shape = 'u8[32768]{0}', space=vmem, size = 0x8000, scoped, tag = 'output window, operand 0, single buffered']
    %25 = vsyncpa [#allocation8], 0
    %26 = vsyncpa [#allocation11], 0
    %27 = vsyncpa [#allocation14], 0
    %28 = vsyncpa [#allocation17], 0
    %29 = vsyncpa [#allocation9], 0
    // Predicated region
    $region2: #{_forward_padded.1} parent=1 // pred_check
      _
    $region3: #{_forward_padded.1} parent=1 // pred_check_branch
      %31 = sbr.rel (0) target = $region5
    $region4: #{_forward_padded.1} parent=1 // pred_region
      _
    $region5: #{_forward_padded.1} parent=1 // pred_fallthru
      _
    // Predicated region
    $region6: #{_forward_padded.1} parent=1 // pred_check
      _
    $region7: #{_forward_padded.1} parent=1 // pred_check_branch
      %33 = sbr.rel (0) target = $region9
    $region8: #{_forward_padded.1} parent=1 // pred_region
      _
    $region9: #{_forward_padded.1} parent=1 // pred_fallthru
      _
    // Predicated region
    $region10: #{_forward_padded.1} parent=1 // pred_check
      _
    $region11: #{_forward_padded.1} parent=1 // pred_check_branch
      %35 = sbr.rel (0) target = $region13
    $region12: #{_forward_padded.1} parent=1 // pred_region
      %37 = vsyncadd [#allocation8], 0
      %s38 = sshll.u32 %s3, 4
      %s39 = int_to_ptr.hbm [resolvable:$true] %s38
      %s40 = sshll.u32 [#allocation7], 4
      %s41 = int_to_ptr.vmem [resolvable:$true] %s40
      %46 = dma.hbm_to_vmem [thread:$0]  %s39, 8192, %s41, [#allocation8], 512, 512, 32
    $region13: #{_forward_padded.1} parent=1 // pred_fallthru
      _
    // Predicated region
    $region14: #{_forward_padded.1} parent=1 // pred_check
      _
    $region15: #{_forward_padded.1} parent=1 // pred_check_branch
      %48 = sbr.rel (0) target = $region17
    $region16: #{_forward_padded.1} parent=1 // pred_region
      %50 = vsyncadd [#allocation11], 0
      %s51 = sshll.u32 %s4, 4
      %s52 = int_to_ptr.hbm [resolvable:$true] %s51
      %s53 = sshll.u32 [#allocation10], 4
      %s54 = int_to_ptr.vmem [resolvable:$true] %s53
      %59 = dma.hbm_to_vmem [thread:$0]  %s52, 8192, %s54, [#allocation11], 512, 512, 32
    $region17: #{_forward_padded.1} parent=1 // pred_fallthru
      _
    // Predicated region
    $region18: #{_forward_padded.1} parent=1 // pred_check
      _
    $region19: #{_forward_padded.1} parent=1 // pred_check_branch
      %61 = sbr.rel (0) target = $region21
    $region20: #{_forward_padded.1} parent=1 // pred_region
      _
    $region21: #{_forward_padded.1} parent=1 // pred_fallthru
      _
    // Predicated region
    $region22: #{_forward_padded.1} parent=1 // pred_check
      _
    $region23: #{_forward_padded.1} parent=1 // pred_check_branch
      %63 = sbr.rel (0) target = $region25
    $region24: #{_forward_padded.1} parent=1 // pred_region
      %65 = vsyncadd [#allocation11], 0
      %s66 = sshll.u32 %s6, 4
      %s67 = int_to_ptr.hbm [resolvable:$true] %s66
      %s68 = sshll.u32 [#allocation12], 4
      %s69 = int_to_ptr.vmem [resolvable:$true] %s68
      %74 = dma.hbm_to_vmem [thread:$0]  %s67, 2048, %s69, [#allocation11], 128, 128, 8
    $region25: #{_forward_padded.1} parent=1 // pred_fallthru
      _
    // Predicated region
    $region26: #{_forward_padded.1} parent=1 // pred_check
      _
    $region27: #{_forward_padded.1} parent=1 // pred_check_branch
      %76 = sbr.rel (0) target = $region29
    $region28: #{_forward_padded.1} parent=1 // pred_region
      %78 = vsyncadd [#allocation14], 0
      %s79 = sshll.u32 %s7, 4
      %s80 = int_to_ptr.hbm [resolvable:$true] %s79
      %s81 = sshll.u32 [#allocation13], 4
      %s82 = int_to_ptr.vmem [resolvable:$true] %s81
      %87 = dma.hbm_to_vmem [thread:$0]  %s80, 8192, %s82, [#allocation14], 512, 512, 32
    $region29: #{_forward_padded.1} parent=1 // pred_fallthru
      _
    // Predicated region
    $region30: #{_forward_padded.1} parent=1 // pred_check
      _
    $region31: #{_forward_padded.1} parent=1 // pred_check_branch
      %89 = sbr.rel (0) target = $region33
    $region32: #{_forward_padded.1} parent=1 // pred_region
      %91 = vsyncadd [#allocation14], 0
      %s92 = sshll.u32 %s8, 4
      %s93 = int_to_ptr.hbm [resolvable:$true] %s92
      %s94 = sshll.u32 [#allocation15], 4
      %s95 = int_to_ptr.vmem [resolvable:$true] %s94
      %100 = dma.hbm_to_vmem [thread:$0]  %s93, 8192, %s95, [#allocation14], 512, 512, 32
    $region33: #{_forward_padded.1} parent=1 // pred_fallthru
      _
    // Predicated region
    $region34: #{_forward_padded.1} parent=1 // pred_check
      _
    $region35: #{_forward_padded.1} parent=1 // pred_check_branch
      %102 = sbr.rel (0) target = $region37
    $region36: #{_forward_padded.1} parent=1 // pred_region
      _
    $region37: #{_forward_padded.1} parent=1 // pred_fallthru
      _
    // Predicated region
    $region38: #{_forward_padded.1} parent=1 // pred_check
      _
    $region39: #{_forward_padded.1} parent=1 // pred_check_branch
      %104 = sbr.rel (0) target = $region41
    $region40: #{_forward_padded.1} parent=1 // pred_region
      %106 = vsyncadd [#allocation17], 0
      %s107 = sshll.u32 %s10, 4
      %s108 = int_to_ptr.hbm [resolvable:$true] %s107
      %s109 = sshll.u32 [#allocation16], 4
      %s110 = int_to_ptr.vmem [resolvable:$true] %s109
      %115 = dma.hbm_to_vmem [thread:$0]  %s108, 2048, %s110, [#allocation17], 128, 128, 8
    $region41: #{_forward_padded.1} parent=1 // pred_fallthru
      _
    // Predicated region
    $region42: #{_forward_padded.1} parent=1 // pred_check
      _
    $region43: #{_forward_padded.1} parent=1 // pred_check_branch
      %117 = sbr.rel (0) target = $region45
    $region44: #{_forward_padded.1} parent=1 // pred_region
      _
    $region45: #{_forward_padded.1} parent=1 // pred_fallthru
      _
    // Predicated region
    $region46: #{_forward_padded.1} parent=1 // pred_check
      _
    $region47: #{_forward_padded.1} parent=1 // pred_check_branch
      %119 = sbr.rel (0) target = $region49
    $region48: #{_forward_padded.1} parent=1 // pred_region
      %121 = dma.done [#allocation8], 8192
    $region49: #{_forward_padded.1} parent=1 // pred_fallthru
      _
    // Predicated region
    $region50: #{_forward_padded.1} parent=1 // pred_check
      _
    $region51: #{_forward_padded.1} parent=1 // pred_check_branch
      %123 = sbr.rel (0) target = $region53
    $region52: #{_forward_padded.1} parent=1 // pred_region
      %125 = dma.done [#allocation11], 8192
    $region53: #{_forward_padded.1} parent=1 // pred_fallthru
      _
    // Predicated region
    $region54: #{_forward_padded.1} parent=1 // pred_check
      _
    $region55: #{_forward_padded.1} parent=1 // pred_check_branch
      %127 = sbr.rel (0) target = $region57
    $region56: #{_forward_padded.1} parent=1 // pred_region
      %129 = dma.done [#allocation11], 2048
    $region57: #{_forward_padded.1} parent=1 // pred_fallthru
      _
    // Predicated region
    $region58: #{_forward_padded.1} parent=1 // pred_check
      _
    $region59: #{_forward_padded.1} parent=1 // pred_check_branch
      %131 = sbr.rel (0) target = $region61
    $region60: #{_forward_padded.1} parent=1 // pred_region
      %133 = dma.done [#allocation14], 8192
    $region61: #{_forward_padded.1} parent=1 // pred_fallthru
      _
    // Predicated region
    $region62: #{_forward_padded.1} parent=1 // pred_check
      _
    $region63: #{_forward_padded.1} parent=1 // pred_check_branch
      %135 = sbr.rel (0) target = $region65
    $region64: #{_forward_padded.1} parent=1 // pred_region
      %137 = dma.done [#allocation14], 8192
    $region65: #{_forward_padded.1} parent=1 // pred_fallthru
      _
    // Predicated region
    $region66: #{_forward_padded.1} parent=1 // pred_check
      _
    $region67: #{_forward_padded.1} parent=1 // pred_check_branch
      %139 = sbr.rel (0) target = $region69
    $region68: #{_forward_padded.1} parent=1 // pred_region
      %141 = dma.done [#allocation17], 2048
    $region69: #{_forward_padded.1} parent=1 // pred_fallthru
      _
    %v142 = vlaneseq
    %v143 = vand.u32 %v142, 127
    %v144 = vcvt.s32.f32 %v143
    %v145 = vld [vmem:[%s5] sm:$0xf]
    %v146 = vld [vmem:[%s9] sm:$0xf]
    %v147 = vld [vmem:[%s11] sm:$0x1]
    %148 = vst [vmem:[#allocation2] sm:$0xff] 0.0
    %149 = vst [vmem:[#allocation3] sm:$0xff] 0.0
    loop: start=0, step=1, limit=8
    $region70: #{_forward_padded.1} parent=1 // loop_pre_header
      _
    $region71: #{_forward_padded.1} parent=1 // loop_header
      %s151 = sphi 0, %s155
      %p152 = scmp.ge.s32.totalorder %s151, 8
    $region72: #{_forward_padded.1} parent=1 // loop_header_branch
      %154 = sbr.rel (%p152) target = $region76
    $region73: #{_forward_padded.1} parent=1 // loop_body
      %s156 = smul.u32 %s151, 8
      %s157 = scalar_lea.vmem %s1, %s156
      %v158 = vld [vmem:[%s157] sm:$0xff]
      %v159 = vld [vmem:[#allocation2] sm:$0xff]
      %v160 = vld [vmem:[#allocation3] sm:$0xff]
      %v161 = vld [vmem:[#allocation7] sm:$0xff]
      %v162 = vld [vmem:[#allocation7 + $0x8] sm:$0xff]
      %v163 = vld [vmem:[#allocation7 + $0x10] sm:$0xff]
      %v164 = vld [vmem:[#allocation7 + $0x18] sm:$0xff]
      %v165 = vld [vmem:[#allocation7 + $0x20] sm:$0xff]
      %v166 = vld [vmem:[#allocation7 + $0x28] sm:$0xff]
      %v167 = vld [vmem:[#allocation7 + $0x30] sm:$0xff]
      %v168 = vld [vmem:[#allocation7 + $0x38] sm:$0xff]
      %v169 = vld [vmem:[#allocation7 + $0x40] sm:$0xff]
      %v170 = vld [vmem:[#allocation7 + $0x48] sm:$0xff]
      %v171 = vld [vmem:[#allocation7 + $0x50] sm:$0xff]
      %v172 = vld [vmem:[#allocation7 + $0x58] sm:$0xff]
      %v173 = vld [vmem:[#allocation7 + $0x60] sm:$0xff]
      %v174 = vld [vmem:[#allocation7 + $0x68] sm:$0xff]
      %v175 = vld [vmem:[#allocation7 + $0x70] sm:$0xff]
      %v176 = vld [vmem:[#allocation7 + $0x78] sm:$0xff]
      %v177 = vld [vmem:[#allocation7 + $0x80] sm:$0xff]
      %v178 = vld [vmem:[#allocation7 + $0x88] sm:$0xff]
      %v179 = vld [vmem:[#allocation7 + $0x90] sm:$0xff]
      %v180 = vld [vmem:[#allocation7 + $0x98] sm:$0xff]
      %v181 = vld [vmem:[#allocation7 + $0xa0] sm:$0xff]
      %v182 = vld [vmem:[#allocation7 + $0xa8] sm:$0xff]
      %v183 = vld [vmem:[#allocation7 + $0xb0] sm:$0xff]
      %v184 = vld [vmem:[#allocation7 + $0xb8] sm:$0xff]
      %v185 = vld [vmem:[#allocation7 + $0xc0] sm:$0xff]
      %v186 = vld [vmem:[#allocation7 + $0xc8] sm:$0xff]
      %v187 = vld [vmem:[#allocation7 + $0xd0] sm:$0xff]
      %v188 = vld [vmem:[#allocation7 + $0xd8] sm:$0xff]
      %v189 = vld [vmem:[#allocation7 + $0xe0] sm:$0xff]
      %v190 = vld [vmem:[#allocation7 + $0xe8] sm:$0xff]
      %v191 = vld [vmem:[#allocation7 + $0xf0] sm:$0xff]
      %v192 = vld [vmem:[#allocation7 + $0xf8] sm:$0xff]
      %v193 = vld [vmem:[#allocation7 + $0x100] sm:$0xff]
      %v194 = vld [vmem:[#allocation7 + $0x108] sm:$0xff]
      %v195 = vld [vmem:[#allocation7 + $0x110] sm:$0xff]
      %v196 = vld [vmem:[#allocation7 + $0x118] sm:$0xff]
      %v197 = vld [vmem:[#allocation7 + $0x120] sm:$0xff]
      %v198 = vld [vmem:[#allocation7 + $0x128] sm:$0xff]
      %v199 = vld [vmem:[#allocation7 + $0x130] sm:$0xff]
      %v200 = vld [vmem:[#allocation7 + $0x138] sm:$0xff]
      %v201 = vld [vmem:[#allocation7 + $0x140] sm:$0xff]
      %v202 = vld [vmem:[#allocation7 + $0x148] sm:$0xff]
      %v203 = vld [vmem:[#allocation7 + $0x150] sm:$0xff]
      %v204 = vld [vmem:[#allocation7 + $0x158] sm:$0xff]
      %v205 = vld [vmem:[#allocation7 + $0x160] sm:$0xff]
      %v206 = vld [vmem:[#allocation7 + $0x168] sm:$0xff]
      %v207 = vld [vmem:[#allocation7 + $0x170] sm:$0xff]
      %v208 = vld [vmem:[#allocation7 + $0x178] sm:$0xff]
      %v209 = vld [vmem:[#allocation7 + $0x180] sm:$0xff]
      %v210 = vld [vmem:[#allocation7 + $0x188] sm:$0xff]
      %v211 = vld [vmem:[#allocation7 + $0x190] sm:$0xff]
      %v212 = vld [vmem:[#allocation7 + $0x198] sm:$0xff]
      %v213 = vld [vmem:[#allocation7 + $0x1a0] sm:$0xff]
      %v214 = vld [vmem:[#allocation7 + $0x1a8] sm:$0xff]
      %v215 = vld [vmem:[#allocation7 + $0x1b0] sm:$0xff]
      %v216 = vld [vmem:[#allocation7 + $0x1b8] sm:$0xff]
      %v217 = vld [vmem:[#allocation7 + $0x1c0] sm:$0xff]
      %v218 = vld [vmem:[#allocation7 + $0x1c8] sm:$0xff]
      %v219 = vld [vmem:[#allocation7 + $0x1d0] sm:$0xff]
      %v220 = vld [vmem:[#allocation7 + $0x1d8] sm:$0xff]
      %v221 = vld [vmem:[#allocation7 + $0x1e0] sm:$0xff]
      %v222 = vld [vmem:[#allocation7 + $0x1e8] sm:$0xff]
      %v223 = vld [vmem:[#allocation7 + $0x1f0] sm:$0xff]
      %v224 = vld [vmem:[#allocation7 + $0x1f8] sm:$0xff]
      %v225 = vld [vmem:[#allocation10] sm:$0xff]
      %v226 = vld [vmem:[#allocation10 + $0x8] sm:$0xff]
      %v227 = vld [vmem:[#allocation10 + $0x10] sm:$0xff]
      %v228 = vld [vmem:[#allocation10 + $0x18] sm:$0xff]
      %v229 = vld [vmem:[#allocation10 + $0x20] sm:$0xff]
      %v230 = vld [vmem:[#allocation10 + $0x28] sm:$0xff]
      %v231 = vld [vmem:[#allocation10 + $0x30] sm:$0xff]
      %v232 = vld [vmem:[#allocation10 + $0x38] sm:$0xff]
      %v233 = vld [vmem:[#allocation10 + $0x40] sm:$0xff]
      %v234 = vld [vmem:[#allocation10 + $0x48] sm:$0xff]
      %v235 = vld [vmem:[#allocation10 + $0x50] sm:$0xff]
      %v236 = vld [vmem:[#allocation10 + $0x58] sm:$0xff]
      %v237 = vld [vmem:[#allocation10 + $0x60] sm:$0xff]
      %v238 = vld [vmem:[#allocation10 + $0x68] sm:$0xff]
      %v239 = vld [vmem:[#allocation10 + $0x70] sm:$0xff]
      %v240 = vld [vmem:[#allocation10 + $0x78] sm:$0xff]
      %v241 = vld [vmem:[#allocation10 + $0x80] sm:$0xff]
      %v242 = vld [vmem:[#allocation10 + $0x88] sm:$0xff]
      %v243 = vld [vmem:[#allocation10 + $0x90] sm:$0xff]
      %v244 = vld [vmem:[#allocation10 + $0x98] sm:$0xff]
      %v245 = vld [vmem:[#allocation10 + $0xa0] sm:$0xff]
      %v246 = vld [vmem:[#allocation10 + $0xa8] sm:$0xff]
      %v247 = vld [vmem:[#allocation10 + $0xb0] sm:$0xff]
      %v248 = vld [vmem:[#allocation10 + $0xb8] sm:$0xff]
      %v249 = vld [vmem:[#allocation10 + $0xc0] sm:$0xff]
      %v250 = vld [vmem:[#allocation10 + $0xc8] sm:$0xff]
      %v251 = vld [vmem:[#allocation10 + $0xd0] sm:$0xff]
      %v252 = vld [vmem:[#allocation10 + $0xd8] sm:$0xff]
      %v253 = vld [vmem:[#allocation10 + $0xe0] sm:$0xff]
      %v254 = vld [vmem:[#allocation10 + $0xe8] sm:$0xff]
      %v255 = vld [vmem:[#allocation10 + $0xf0] sm:$0xff]
      %v256 = vld [vmem:[#allocation10 + $0xf8] sm:$0xff]
      %v257 = vld [vmem:[#allocation10 + $0x100] sm:$0xff]
      %v258 = vld [vmem:[#allocation10 + $0x108] sm:$0xff]
      %v259 = vld [vmem:[#allocation10 + $0x110] sm:$0xff]
      %v260 = vld [vmem:[#allocation10 + $0x118] sm:$0xff]
      %v261 = vld [vmem:[#allocation10 + $0x120] sm:$0xff]
      %v262 = vld [vmem:[#allocation10 + $0x128] sm:$0xff]
      %v263 = vld [vmem:[#allocation10 + $0x130] sm:$0xff]
      %v264 = vld [vmem:[#allocation10 + $0x138] sm:$0xff]
      %v265 = vld [vmem:[#allocation10 + $0x140] sm:$0xff]
      %v266 = vld [vmem:[#allocation10 + $0x148] sm:$0xff]
      %v267 = vld [vmem:[#allocation10 + $0x150] sm:$0xff]
      %v268 = vld [vmem:[#allocation10 + $0x158] sm:$0xff]
      %v269 = vld [vmem:[#allocation10 + $0x160] sm:$0xff]
      %v270 = vld [vmem:[#allocation10 + $0x168] sm:$0xff]
      %v271 = vld [vmem:[#allocation10 + $0x170] sm:$0xff]
      %v272 = vld [vmem:[#allocation10 + $0x178] sm:$0xff]
      %v273 = vld [vmem:[#allocation10 + $0x180] sm:$0xff]
      %v274 = vld [vmem:[#allocation10 + $0x188] sm:$0xff]
      %v275 = vld [vmem:[#allocation10 + $0x190] sm:$0xff]
      %v276 = vld [vmem:[#allocation10 + $0x198] sm:$0xff]
      %v277 = vld [vmem:[#allocation10 + $0x1a0] sm:$0xff]
      %v278 = vld [vmem:[#allocation10 + $0x1a8] sm:$0xff]
      %v279 = vld [vmem:[#allocation10 + $0x1b0] sm:$0xff]
      %v280 = vld [vmem:[#allocation10 + $0x1b8] sm:$0xff]
      %v281 = vld [vmem:[#allocation10 + $0x1c0] sm:$0xff]
      %v282 = vld [vmem:[#allocation10 + $0x1c8] sm:$0xff]
      %v283 = vld [vmem:[#allocation10 + $0x1d0] sm:$0xff]
      %v284 = vld [vmem:[#allocation10 + $0x1d8] sm:$0xff]
      %v285 = vld [vmem:[#allocation10 + $0x1e0] sm:$0xff]
      %v286 = vld [vmem:[#allocation10 + $0x1e8] sm:$0xff]
      %v287 = vld [vmem:[#allocation10 + $0x1f0] sm:$0xff]
      %v288 = vld [vmem:[#allocation10 + $0x1f8] sm:$0xff]
      %289 = vmatpush.msra.mxu0 %v285
      %290 = vmatpush.msra.mxu0 %v281
      %291 = vmatpush.msra.mxu0 %v277
      %292 = vmatpush.msra.mxu0 %v273
      %293 = vmatpush.msra.mxu0 %v269
      %294 = vmatpush.msra.mxu0 %v265
      %295 = vmatpush.msra.mxu0 %v261
      %296 = vmatpush.msra.mxu0 %v257
      %297 = vmatpush.msra.mxu0 %v253
      %298 = vmatpush.msra.mxu0 %v249
      %299 = vmatpush.msra.mxu0 %v245
      %300 = vmatpush.msra.mxu0 %v241
      %301 = vmatpush.msra.mxu0 %v237
      %302 = vmatpush.msra.mxu0 %v233
      %303 = vmatpush.msra.mxu0 %v229
      %304 = vmatpush.msra.mxu0 %v225
      %305 = vmatmul.f32.gmra.mxu0 %v159
      %v306 = vpop.f32.mrf.mxu0
      %v307 = vadd.f32 0.0, %v306
      %308 = vdwg.mxu0
      %309 = vmatpush.msra.mxu0 %v286
      %310 = vmatpush.msra.mxu0 %v282
      %311 = vmatpush.msra.mxu0 %v278
      %312 = vmatpush.msra.mxu0 %v274
      %313 = vmatpush.msra.mxu0 %v270
      %314 = vmatpush.msra.mxu0 %v266
      %315 = vmatpush.msra.mxu0 %v262
      %316 = vmatpush.msra.mxu0 %v258
      %317 = vmatpush.msra.mxu0 %v254
      %318 = vmatpush.msra.mxu0 %v250
      %319 = vmatpush.msra.mxu0 %v246
      %320 = vmatpush.msra.mxu0 %v242
      %321 = vmatpush.msra.mxu0 %v238
      %322 = vmatpush.msra.mxu0 %v234
      %323 = vmatpush.msra.mxu0 %v230
      %324 = vmatpush.msra.mxu0 %v226
      %325 = vmatmul.f32.gmra.mxu0 %v159
      %v326 = vpop.f32.mrf.mxu0
      %v327 = vadd.f32 0.0, %v326
      %328 = vdwg.mxu0
      %329 = vmatpush.msra.mxu0 %v287
      %330 = vmatpush.msra.mxu0 %v283
      %331 = vmatpush.msra.mxu0 %v279
      %332 = vmatpush.msra.mxu0 %v275
      %333 = vmatpush.msra.mxu0 %v271
      %334 = vmatpush.msra.mxu0 %v267
      %335 = vmatpush.msra.mxu0 %v263
      %336 = vmatpush.msra.mxu0 %v259
      %337 = vmatpush.msra.mxu0 %v255
      %338 = vmatpush.msra.mxu0 %v251
      %339 = vmatpush.msra.mxu0 %v247
      %340 = vmatpush.msra.mxu0 %v243
      %341 = vmatpush.msra.mxu0 %v239
      %342 = vmatpush.msra.mxu0 %v235
      %343 = vmatpush.msra.mxu0 %v231
      %344 = vmatpush.msra.mxu0 %v227
      %345 = vmatmul.f32.gmra.mxu0 %v159
      %v346 = vpop.f32.mrf.mxu0
      %v347 = vadd.f32 0.0, %v346
      %348 = vdwg.mxu0
      %349 = vmatpush.msra.mxu0 %v288
      %350 = vmatpush.msra.mxu0 %v284
      %351 = vmatpush.msra.mxu0 %v280
      %352 = vmatpush.msra.mxu0 %v276
      %353 = vmatpush.msra.mxu0 %v272
      %354 = vmatpush.msra.mxu0 %v268
      %355 = vmatpush.msra.mxu0 %v264
      %356 = vmatpush.msra.mxu0 %v260
      %357 = vmatpush.msra.mxu0 %v256
      %358 = vmatpush.msra.mxu0 %v252
      %359 = vmatpush.msra.mxu0 %v248
      %360 = vmatpush.msra.mxu0 %v244
      %361 = vmatpush.msra.mxu0 %v240
      %362 = vmatpush.msra.mxu0 %v236
      %363 = vmatpush.msra.mxu0 %v232
      %364 = vmatpush.msra.mxu0 %v228
      %365 = vmatmul.f32.gmra.mxu0 %v159
      %v366 = vpop.f32.mrf.mxu0
      %v367 = vadd.f32 0.0, %v366
      %368 = vdwg.mxu0
      %369 = vmatpush.msra.mxu0 %v221
      %370 = vmatpush.msra.mxu0 %v217
      %371 = vmatpush.msra.mxu0 %v213
      %372 = vmatpush.msra.mxu0 %v209
      %373 = vmatpush.msra.mxu0 %v205
      %374 = vmatpush.msra.mxu0 %v201
      %375 = vmatpush.msra.mxu0 %v197
      %376 = vmatpush.msra.mxu0 %v193
      %377 = vmatpush.msra.mxu0 %v189
      %378 = vmatpush.msra.mxu0 %v185
      %379 = vmatpush.msra.mxu0 %v181
      %380 = vmatpush.msra.mxu0 %v177
      %381 = vmatpush.msra.mxu0 %v173
      %382 = vmatpush.msra.mxu0 %v169
      %383 = vmatpush.msra.mxu0 %v165
      %384 = vmatpush.msra.mxu0 %v161
      %385 = vmatmul.f32.gmra.mxu0 %v158
      %v386 = vpop.f32.mrf.mxu0
      %v387 = vadd.f32 %v307, %v386
      %388 = vdwg.mxu0
      %389 = vmatpush.msra.mxu0 %v222
      %390 = vmatpush.msra.mxu0 %v218
      %391 = vmatpush.msra.mxu0 %v214
      %392 = vmatpush.msra.mxu0 %v210
      %393 = vmatpush.msra.mxu0 %v206
      %394 = vmatpush.msra.mxu0 %v202
      %395 = vmatpush.msra.mxu0 %v198
      %396 = vmatpush.msra.mxu0 %v194
      %397 = vmatpush.msra.mxu0 %v190
      %398 = vmatpush.msra.mxu0 %v186
      %399 = vmatpush.msra.mxu0 %v182
      %400 = vmatpush.msra.mxu0 %v178
      %401 = vmatpush.msra.mxu0 %v174
      %402 = vmatpush.msra.mxu0 %v170
      %403 = vmatpush.msra.mxu0 %v166
      %404 = vmatpush.msra.mxu0 %v162
      %405 = vmatmul.f32.gmra.mxu0 %v158
      %v406 = vpop.f32.mrf.mxu0
      %v407 = vadd.f32 %v327, %v406
      %408 = vdwg.mxu0
      %409 = vmatpush.msra.mxu0 %v223
      %410 = vmatpush.msra.mxu0 %v219
      %411 = vmatpush.msra.mxu0 %v215
      %412 = vmatpush.msra.mxu0 %v211
      %413 = vmatpush.msra.mxu0 %v207
      %414 = vmatpush.msra.mxu0 %v203
      %415 = vmatpush.msra.mxu0 %v199
      %416 = vmatpush.msra.mxu0 %v195
      %417 = vmatpush.msra.mxu0 %v191
      %418 = vmatpush.msra.mxu0 %v187
      %419 = vmatpush.msra.mxu0 %v183
      %420 = vmatpush.msra.mxu0 %v179
      %421 = vmatpush.msra.mxu0 %v175
      %422 = vmatpush.msra.mxu0 %v171
      %423 = vmatpush.msra.mxu0 %v167
      %424 = vmatpush.msra.mxu0 %v163
      %425 = vmatmul.f32.gmra.mxu0 %v158
      %v426 = vpop.f32.mrf.mxu0
      %v427 = vadd.f32 %v347, %v426
      %428 = vdwg.mxu0
      %429 = vmatpush.msra.mxu0 %v224
      %430 = vmatpush.msra.mxu0 %v220
      %431 = vmatpush.msra.mxu0 %v216
      %432 = vmatpush.msra.mxu0 %v212
      %433 = vmatpush.msra.mxu0 %v208
      %434 = vmatpush.msra.mxu0 %v204
      %435 = vmatpush.msra.mxu0 %v200
      %436 = vmatpush.msra.mxu0 %v196
      %437 = vmatpush.msra.mxu0 %v192
      %438 = vmatpush.msra.mxu0 %v188
      %439 = vmatpush.msra.mxu0 %v184
      %440 = vmatpush.msra.mxu0 %v180
      %441 = vmatpush.msra.mxu0 %v176
      %442 = vmatpush.msra.mxu0 %v172
      %443 = vmatpush.msra.mxu0 %v168
      %444 = vmatpush.msra.mxu0 %v164
      %445 = vmatmul.f32.gmra.mxu0 %v158
      %v446 = vpop.f32.mrf.mxu0
      %v447 = vadd.f32 %v367, %v446
      %448 = vdwg.mxu0
      %v450 = vperm.slane %v145, 0
      %v451 = vperm.slane %v145, 1
      %v452 = vperm.slane %v145, 2
      %v453 = vperm.slane %v145, 3
      %v458 = vadd.f32 %v387, %v450
      %v459 = vadd.f32 %v407, %v451
      %v460 = vadd.f32 %v427, %v452
      %v461 = vadd.f32 %v447, %v453
      %v462 = vxor.u32 %v458, 2147483648
      %v463 = vmul.f32 %v462, 1.442695
      %v464 = vpow.pop %v463
      %v465 = vadd.f32 %v464, 1.0
      %v466 = vrcp.pop %v465
      %v467 = vmul.f32 %v465, %v466
      %v468 = vsub.f32 1.0, %v467
      %v469 = vmul.f32 %v466, %v468
      %v470 = vadd.f32 %v466, %v469
      %vm471 = vweird.f32 %v465
      %vm472 = vweird.f32 %v466
      %vm473 = vmor %vm471, %vm472
      %v474 = vsel %vm473, %v466, %v470
      %v475 = vand.u32 2147483647, %v465
      %vm476 = vcmp.eq.f32.partialorder %v475, 8.507059e+37
      %v477 = vand.u32 %v465, 2147483648
      %v478 = vor.u32 1.1754944e-38, %v477
      %v479 = vsel %vm476, %v478, %v474
      %v480 = vmul.f32 1.0, %v479
      %v481 = vxor.u32 %v459, 2147483648
      %v482 = vmul.f32 %v481, 1.442695
      %v483 = vpow.pop %v482
      %v484 = vadd.f32 %v483, 1.0
      %v485 = vrcp.pop %v484
      %v486 = vmul.f32 %v484, %v485
      %v487 = vsub.f32 1.0, %v486
      %v488 = vmul.f32 %v485, %v487
      %v489 = vadd.f32 %v485, %v488
      %vm490 = vweird.f32 %v484
      %vm491 = vweird.f32 %v485
      %vm492 = vmor %vm490, %vm491
      %v493 = vsel %vm492, %v485, %v489
      %v494 = vand.u32 2147483647, %v484
      %vm495 = vcmp.eq.f32.partialorder %v494, 8.507059e+37
      %v496 = vand.u32 %v484, 2147483648
      %v497 = vor.u32 1.1754944e-38, %v496
      %v498 = vsel %vm495, %v497, %v493
      %v499 = vmul.f32 1.0, %v498
      %v500 = vtanh.pop %v460
      %v501 = vxor.u32 %v461, 2147483648
      %v502 = vmul.f32 %v501, 1.442695
      %v503 = vpow.pop %v502
      %v504 = vadd.f32 %v503, 1.0
      %v505 = vrcp.pop %v504
      %v506 = vmul.f32 %v504, %v505
      %v507 = vsub.f32 1.0, %v506
      %v508 = vmul.f32 %v505, %v507
      %v509 = vadd.f32 %v505, %v508
      %vm510 = vweird.f32 %v504
      %vm511 = vweird.f32 %v505
      %vm512 = vmor %vm510, %vm511
      %v513 = vsel %vm512, %v505, %v509
      %v514 = vand.u32 2147483647, %v504
      %vm515 = vcmp.eq.f32.partialorder %v514, 8.507059e+37
      %v516 = vand.u32 %v504, 2147483648
      %v517 = vor.u32 1.1754944e-38, %v516
      %v518 = vsel %vm515, %v517, %v513
      %v519 = vmul.f32 1.0, %v518
      %v520 = vmul.f32 %v499, %v160
      %v521 = vmul.f32 %v480, %v500
      %v522 = vadd.f32 %v520, %v521
      %v523 = vtanh.pop %v522
      %v524 = vmul.f32 %v519, %v523
      %525 = vst [vmem:[#allocation2] sm:$0xff] %v524
      %526 = vst [vmem:[#allocation3] sm:$0xff] %v522
    $region74: #{_forward_padded.1} parent=1 // loop_footer
      %s155 = sadd.s32 1, %s151
    $region75: #{_forward_padded.1} parent=1 // loop_footer_branch
      %150 = sbr.rel target = $region71
    $region76: #{_forward_padded.1} parent=1 // loop_exit
      _
    %v527 = vld [vmem:[#allocation12] sm:$0x1]
    %v528 = vperm.slane %v527, 0
    %529 = vst [vmem:[#allocation4] sm:$0xff] %v528
    loop: start=0, step=1, limit=8
    $region77: #{_forward_padded.1} parent=1 // loop_pre_header
      _
    $region78: #{_forward_padded.1} parent=1 // loop_header
      %s531 = sphi 0, %s535
      %p532 = scmp.ge.s32.totalorder %s531, 8
    $region79: #{_forward_padded.1} parent=1 // loop_header_branch
      %534 = sbr.rel (%p532) target = $region83
    $region80: #{_forward_padded.1} parent=1 // loop_body
      %v536 = vld [vmem:[#allocation4] sm:$0xff]
      %v537 = vld [vmem:[#allocation2] sm:$0xff]
      %v538 = vld [vmem:[#allocation3] sm:$0xff]
      %v539 = vld [vmem:[#allocation13] sm:$0xff]
      %v540 = vld [vmem:[#allocation13 + $0x8] sm:$0xff]
      %v541 = vld [vmem:[#allocation13 + $0x10] sm:$0xff]
      %v542 = vld [vmem:[#allocation13 + $0x18] sm:$0xff]
      %v543 = vld [vmem:[#allocation13 + $0x20] sm:$0xff]
      %v544 = vld [vmem:[#allocation13 + $0x28] sm:$0xff]
      %v545 = vld [vmem:[#allocation13 + $0x30] sm:$0xff]
      %v546 = vld [vmem:[#allocation13 + $0x38] sm:$0xff]
      %v547 = vld [vmem:[#allocation13 + $0x40] sm:$0xff]
      %v548 = vld [vmem:[#allocation13 + $0x48] sm:$0xff]
      %v549 = vld [vmem:[#allocation13 + $0x50] sm:$0xff]
      %v550 = vld [vmem:[#allocation13 + $0x58] sm:$0xff]
      %v551 = vld [vmem:[#allocation13 + $0x60] sm:$0xff]
      %v552 = vld [vmem:[#allocation13 + $0x68] sm:$0xff]
      %v553 = vld [vmem:[#allocation13 + $0x70] sm:$0xff]
      %v554 = vld [vmem:[#allocation13 + $0x78] sm:$0xff]
      %v555 = vld [vmem:[#allocation13 + $0x80] sm:$0xff]
      %v556 = vld [vmem:[#allocation13 + $0x88] sm:$0xff]
      %v557 = vld [vmem:[#allocation13 + $0x90] sm:$0xff]
      %v558 = vld [vmem:[#allocation13 + $0x98] sm:$0xff]
      %v559 = vld [vmem:[#allocation13 + $0xa0] sm:$0xff]
      %v560 = vld [vmem:[#allocation13 + $0xa8] sm:$0xff]
      %v561 = vld [vmem:[#allocation13 + $0xb0] sm:$0xff]
      %v562 = vld [vmem:[#allocation13 + $0xb8] sm:$0xff]
      %v563 = vld [vmem:[#allocation13 + $0xc0] sm:$0xff]
      %v564 = vld [vmem:[#allocation13 + $0xc8] sm:$0xff]
      %v565 = vld [vmem:[#allocation13 + $0xd0] sm:$0xff]
      %v566 = vld [vmem:[#allocation13 + $0xd8] sm:$0xff]
      %v567 = vld [vmem:[#allocation13 + $0xe0] sm:$0xff]
      %v568 = vld [vmem:[#allocation13 + $0xe8] sm:$0xff]
      %v569 = vld [vmem:[#allocation13 + $0xf0] sm:$0xff]
      %v570 = vld [vmem:[#allocation13 + $0xf8] sm:$0xff]
      %v571 = vld [vmem:[#allocation13 + $0x100] sm:$0xff]
      %v572 = vld [vmem:[#allocation13 + $0x108] sm:$0xff]
      %v573 = vld [vmem:[#allocation13 + $0x110] sm:$0xff]
      %v574 = vld [vmem:[#allocation13 + $0x118] sm:$0xff]
      %v575 = vld [vmem:[#allocation13 + $0x120] sm:$0xff]
      %v576 = vld [vmem:[#allocation13 + $0x128] sm:$0xff]
      %v577 = vld [vmem:[#allocation13 + $0x130] sm:$0xff]
      %v578 = vld [vmem:[#allocation13 + $0x138] sm:$0xff]
      %v579 = vld [vmem:[#allocation13 + $0x140] sm:$0xff]
      %v580 = vld [vmem:[#allocation13 + $0x148] sm:$0xff]
      %v581 = vld [vmem:[#allocation13 + $0x150] sm:$0xff]
      %v582 = vld [vmem:[#allocation13 + $0x158] sm:$0xff]
      %v583 = vld [vmem:[#allocation13 + $0x160] sm:$0xff]
      %v584 = vld [vmem:[#allocation13 + $0x168] sm:$0xff]
      %v585 = vld [vmem:[#allocation13 + $0x170] sm:$0xff]
      %v586 = vld [vmem:[#allocation13 + $0x178] sm:$0xff]
      %v587 = vld [vmem:[#allocation13 + $0x180] sm:$0xff]
      %v588 = vld [vmem:[#allocation13 + $0x188] sm:$0xff]
      %v589 = vld [vmem:[#allocation13 + $0x190] sm:$0xff]
      %v590 = vld [vmem:[#allocation13 + $0x198] sm:$0xff]
      %v591 = vld [vmem:[#allocation13 + $0x1a0] sm:$0xff]
      %v592 = vld [vmem:[#allocation13 + $0x1a8] sm:$0xff]
      %v593 = vld [vmem:[#allocation13 + $0x1b0] sm:$0xff]
      %v594 = vld [vmem:[#allocation13 + $0x1b8] sm:$0xff]
      %v595 = vld [vmem:[#allocation13 + $0x1c0] sm:$0xff]
      %v596 = vld [vmem:[#allocation13 + $0x1c8] sm:$0xff]
      %v597 = vld [vmem:[#allocation13 + $0x1d0] sm:$0xff]
      %v598 = vld [vmem:[#allocation13 + $0x1d8] sm:$0xff]
      %v599 = vld [vmem:[#allocation13 + $0x1e0] sm:$0xff]
      %v600 = vld [vmem:[#allocation13 + $0x1e8] sm:$0xff]
      %v601 = vld [vmem:[#allocation13 + $0x1f0] sm:$0xff]
      %v602 = vld [vmem:[#allocation13 + $0x1f8] sm:$0xff]
      %v603 = vld [vmem:[#allocation15] sm:$0xff]
      %v604 = vld [vmem:[#allocation15 + $0x8] sm:$0xff]
      %v605 = vld [vmem:[#allocation15 + $0x10] sm:$0xff]
      %v606 = vld [vmem:[#allocation15 + $0x18] sm:$0xff]
      %v607 = vld [vmem:[#allocation15 + $0x20] sm:$0xff]
      %v608 = vld [vmem:[#allocation15 + $0x28] sm:$0xff]
      %v609 = vld [vmem:[#allocation15 + $0x30] sm:$0xff]
      %v610 = vld [vmem:[#allocation15 + $0x38] sm:$0xff]
      %v611 = vld [vmem:[#allocation15 + $0x40] sm:$0xff]
      %v612 = vld [vmem:[#allocation15 + $0x48] sm:$0xff]
      %v613 = vld [vmem:[#allocation15 + $0x50] sm:$0xff]
      %v614 = vld [vmem:[#allocation15 + $0x58] sm:$0xff]
      %v615 = vld [vmem:[#allocation15 + $0x60] sm:$0xff]
      %v616 = vld [vmem:[#allocation15 + $0x68] sm:$0xff]
      %v617 = vld [vmem:[#allocation15 + $0x70] sm:$0xff]
      %v618 = vld [vmem:[#allocation15 + $0x78] sm:$0xff]
      %v619 = vld [vmem:[#allocation15 + $0x80] sm:$0xff]
      %v620 = vld [vmem:[#allocation15 + $0x88] sm:$0xff]
      %v621 = vld [vmem:[#allocation15 + $0x90] sm:$0xff]
      %v622 = vld [vmem:[#allocation15 + $0x98] sm:$0xff]
      %v623 = vld [vmem:[#allocation15 + $0xa0] sm:$0xff]
      %v624 = vld [vmem:[#allocation15 + $0xa8] sm:$0xff]
      %v625 = vld [vmem:[#allocation15 + $0xb0] sm:$0xff]
      %v626 = vld [vmem:[#allocation15 + $0xb8] sm:$0xff]
      %v627 = vld [vmem:[#allocation15 + $0xc0] sm:$0xff]
      %v628 = vld [vmem:[#allocation15 + $0xc8] sm:$0xff]
      %v629 = vld [vmem:[#allocation15 + $0xd0] sm:$0xff]
      %v630 = vld [vmem:[#allocation15 + $0xd8] sm:$0xff]
      %v631 = vld [vmem:[#allocation15 + $0xe0] sm:$0xff]
      %v632 = vld [vmem:[#allocation15 + $0xe8] sm:$0xff]
      %v633 = vld [vmem:[#allocation15 + $0xf0] sm:$0xff]
      %v634 = vld [vmem:[#allocation15 + $0xf8] sm:$0xff]
      %v635 = vld [vmem:[#allocation15 + $0x100] sm:$0xff]
      %v636 = vld [vmem:[#allocation15 + $0x108] sm:$0xff]
      %v637 = vld [vmem:[#allocation15 + $0x110] sm:$0xff]
      %v638 = vld [vmem:[#allocation15 + $0x118] sm:$0xff]
      %v639 = vld [vmem:[#allocation15 + $0x120] sm:$0xff]
      %v640 = vld [vmem:[#allocation15 + $0x128] sm:$0xff]
      %v641 = vld [vmem:[#allocation15 + $0x130] sm:$0xff]
      %v642 = vld [vmem:[#allocation15 + $0x138] sm:$0xff]
      %v643 = vld [vmem:[#allocation15 + $0x140] sm:$0xff]
      %v644 = vld [vmem:[#allocation15 + $0x148] sm:$0xff]
      %v645 = vld [vmem:[#allocation15 + $0x150] sm:$0xff]
      %v646 = vld [vmem:[#allocation15 + $0x158] sm:$0xff]
      %v647 = vld [vmem:[#allocation15 + $0x160] sm:$0xff]
      %v648 = vld [vmem:[#allocation15 + $0x168] sm:$0xff]
      %v649 = vld [vmem:[#allocation15 + $0x170] sm:$0xff]
      %v650 = vld [vmem:[#allocation15 + $0x178] sm:$0xff]
      %v651 = vld [vmem:[#allocation15 + $0x180] sm:$0xff]
      %v652 = vld [vmem:[#allocation15 + $0x188] sm:$0xff]
      %v653 = vld [vmem:[#allocation15 + $0x190] sm:$0xff]
      %v654 = vld [vmem:[#allocation15 + $0x198] sm:$0xff]
      %v655 = vld [vmem:[#allocation15 + $0x1a0] sm:$0xff]
      %v656 = vld [vmem:[#allocation15 + $0x1a8] sm:$0xff]
      %v657 = vld [vmem:[#allocation15 + $0x1b0] sm:$0xff]
      %v658 = vld [vmem:[#allocation15 + $0x1b8] sm:$0xff]
      %v659 = vld [vmem:[#allocation15 + $0x1c0] sm:$0xff]
      %v660 = vld [vmem:[#allocation15 + $0x1c8] sm:$0xff]
      %v661 = vld [vmem:[#allocation15 + $0x1d0] sm:$0xff]
      %v662 = vld [vmem:[#allocation15 + $0x1d8] sm:$0xff]
      %v663 = vld [vmem:[#allocation15 + $0x1e0] sm:$0xff]
      %v664 = vld [vmem:[#allocation15 + $0x1e8] sm:$0xff]
      %v665 = vld [vmem:[#allocation15 + $0x1f0] sm:$0xff]
      %v666 = vld [vmem:[#allocation15 + $0x1f8] sm:$0xff]
      %667 = vmatpush.msra.mxu0 %v663
      %668 = vmatpush.msra.mxu0 %v659
      %669 = vmatpush.msra.mxu0 %v655
      %670 = vmatpush.msra.mxu0 %v651
      %671 = vmatpush.msra.mxu0 %v647
      %672 = vmatpush.msra.mxu0 %v643
      %673 = vmatpush.msra.mxu0 %v639
      %674 = vmatpush.msra.mxu0 %v635
      %675 = vmatpush.msra.mxu0 %v631
      %676 = vmatpush.msra.mxu0 %v627
      %677 = vmatpush.msra.mxu0 %v623
      %678 = vmatpush.msra.mxu0 %v619
      %679 = vmatpush.msra.mxu0 %v615
      %680 = vmatpush.msra.mxu0 %v611
      %681 = vmatpush.msra.mxu0 %v607
      %682 = vmatpush.msra.mxu0 %v603
      %683 = vmatmul.f32.gmra.mxu0 %v537
      %v684 = vpop.f32.mrf.mxu0
      %v685 = vadd.f32 0.0, %v684
      %686 = vdwg.mxu0
      %687 = vmatpush.msra.mxu0 %v664
      %688 = vmatpush.msra.mxu0 %v660
      %689 = vmatpush.msra.mxu0 %v656
      %690 = vmatpush.msra.mxu0 %v652
      %691 = vmatpush.msra.mxu0 %v648
      %692 = vmatpush.msra.mxu0 %v644
      %693 = vmatpush.msra.mxu0 %v640
      %694 = vmatpush.msra.mxu0 %v636
      %695 = vmatpush.msra.mxu0 %v632
      %696 = vmatpush.msra.mxu0 %v628
      %697 = vmatpush.msra.mxu0 %v624
      %698 = vmatpush.msra.mxu0 %v620
      %699 = vmatpush.msra.mxu0 %v616
      %700 = vmatpush.msra.mxu0 %v612
      %701 = vmatpush.msra.mxu0 %v608
      %702 = vmatpush.msra.mxu0 %v604
      %703 = vmatmul.f32.gmra.mxu0 %v537
      %v704 = vpop.f32.mrf.mxu0
      %v705 = vadd.f32 0.0, %v704
      %706 = vdwg.mxu0
      %707 = vmatpush.msra.mxu0 %v665
      %708 = vmatpush.msra.mxu0 %v661
      %709 = vmatpush.msra.mxu0 %v657
      %710 = vmatpush.msra.mxu0 %v653
      %711 = vmatpush.msra.mxu0 %v649
      %712 = vmatpush.msra.mxu0 %v645
      %713 = vmatpush.msra.mxu0 %v641
      %714 = vmatpush.msra.mxu0 %v637
      %715 = vmatpush.msra.mxu0 %v633
      %716 = vmatpush.msra.mxu0 %v629
      %717 = vmatpush.msra.mxu0 %v625
      %718 = vmatpush.msra.mxu0 %v621
      %719 = vmatpush.msra.mxu0 %v617
      %720 = vmatpush.msra.mxu0 %v613
      %721 = vmatpush.msra.mxu0 %v609
      %722 = vmatpush.msra.mxu0 %v605
      %723 = vmatmul.f32.gmra.mxu0 %v537
      %v724 = vpop.f32.mrf.mxu0
      %v725 = vadd.f32 0.0, %v724
      %726 = vdwg.mxu0
      %727 = vmatpush.msra.mxu0 %v666
      %728 = vmatpush.msra.mxu0 %v662
      %729 = vmatpush.msra.mxu0 %v658
      %730 = vmatpush.msra.mxu0 %v654
      %731 = vmatpush.msra.mxu0 %v650
      %732 = vmatpush.msra.mxu0 %v646
      %733 = vmatpush.msra.mxu0 %v642
      %734 = vmatpush.msra.mxu0 %v638
      %735 = vmatpush.msra.mxu0 %v634
      %736 = vmatpush.msra.mxu0 %v630
      %737 = vmatpush.msra.mxu0 %v626
      %738 = vmatpush.msra.mxu0 %v622
      %739 = vmatpush.msra.mxu0 %v618
      %740 = vmatpush.msra.mxu0 %v614
      %741 = vmatpush.msra.mxu0 %v610
      %742 = vmatpush.msra.mxu0 %v606
      %743 = vmatmul.f32.gmra.mxu0 %v537
      %v744 = vpop.f32.mrf.mxu0
      %v745 = vadd.f32 0.0, %v744
      %746 = vdwg.mxu0
      %747 = vmatpush.msra.mxu0 %v599
      %748 = vmatpush.msra.mxu0 %v595
      %749 = vmatpush.msra.mxu0 %v591
      %750 = vmatpush.msra.mxu0 %v587
      %751 = vmatpush.msra.mxu0 %v583
      %752 = vmatpush.msra.mxu0 %v579
      %753 = vmatpush.msra.mxu0 %v575
      %754 = vmatpush.msra.mxu0 %v571
      %755 = vmatpush.msra.mxu0 %v567
      %756 = vmatpush.msra.mxu0 %v563
      %757 = vmatpush.msra.mxu0 %v559
      %758 = vmatpush.msra.mxu0 %v555
      %759 = vmatpush.msra.mxu0 %v551
      %760 = vmatpush.msra.mxu0 %v547
      %761 = vmatpush.msra.mxu0 %v543
      %762 = vmatpush.msra.mxu0 %v539
      %763 = vmatmul.f32.gmra.mxu0 %v536
      %v764 = vpop.f32.mrf.mxu0
      %v765 = vadd.f32 %v685, %v764
      %766 = vdwg.mxu0
      %767 = vmatpush.msra.mxu0 %v600
      %768 = vmatpush.msra.mxu0 %v596
      %769 = vmatpush.msra.mxu0 %v592
      %770 = vmatpush.msra.mxu0 %v588
      %771 = vmatpush.msra.mxu0 %v584
      %772 = vmatpush.msra.mxu0 %v580
      %773 = vmatpush.msra.mxu0 %v576
      %774 = vmatpush.msra.mxu0 %v572
      %775 = vmatpush.msra.mxu0 %v568
      %776 = vmatpush.msra.mxu0 %v564
      %777 = vmatpush.msra.mxu0 %v560
      %778 = vmatpush.msra.mxu0 %v556
      %779 = vmatpush.msra.mxu0 %v552
      %780 = vmatpush.msra.mxu0 %v548
      %781 = vmatpush.msra.mxu0 %v544
      %782 = vmatpush.msra.mxu0 %v540
      %783 = vmatmul.f32.gmra.mxu0 %v536
      %v784 = vpop.f32.mrf.mxu0
      %v785 = vadd.f32 %v705, %v784
      %786 = vdwg.mxu0
      %787 = vmatpush.msra.mxu0 %v601
      %788 = vmatpush.msra.mxu0 %v597
      %789 = vmatpush.msra.mxu0 %v593
      %790 = vmatpush.msra.mxu0 %v589
      %791 = vmatpush.msra.mxu0 %v585
      %792 = vmatpush.msra.mxu0 %v581
      %793 = vmatpush.msra.mxu0 %v577
      %794 = vmatpush.msra.mxu0 %v573
      %795 = vmatpush.msra.mxu0 %v569
      %796 = vmatpush.msra.mxu0 %v565
      %797 = vmatpush.msra.mxu0 %v561
      %798 = vmatpush.msra.mxu0 %v557
      %799 = vmatpush.msra.mxu0 %v553
      %800 = vmatpush.msra.mxu0 %v549
      %801 = vmatpush.msra.mxu0 %v545
      %802 = vmatpush.msra.mxu0 %v541
      %803 = vmatmul.f32.gmra.mxu0 %v536
      %v804 = vpop.f32.mrf.mxu0
      %v805 = vadd.f32 %v725, %v804
      %806 = vdwg.mxu0
      %807 = vmatpush.msra.mxu0 %v602
      %808 = vmatpush.msra.mxu0 %v598
      %809 = vmatpush.msra.mxu0 %v594
      %810 = vmatpush.msra.mxu0 %v590
      %811 = vmatpush.msra.mxu0 %v586
      %812 = vmatpush.msra.mxu0 %v582
      %813 = vmatpush.msra.mxu0 %v578
      %814 = vmatpush.msra.mxu0 %v574
      %815 = vmatpush.msra.mxu0 %v570
      %816 = vmatpush.msra.mxu0 %v566
      %817 = vmatpush.msra.mxu0 %v562
      %818 = vmatpush.msra.mxu0 %v558
      %819 = vmatpush.msra.mxu0 %v554
      %820 = vmatpush.msra.mxu0 %v550
      %821 = vmatpush.msra.mxu0 %v546
      %822 = vmatpush.msra.mxu0 %v542
      %823 = vmatmul.f32.gmra.mxu0 %v536
      %v824 = vpop.f32.mrf.mxu0
      %v825 = vadd.f32 %v745, %v824
      %826 = vdwg.mxu0
      %v828 = vperm.slane %v146, 0
      %v829 = vperm.slane %v146, 1
      %v830 = vperm.slane %v146, 2
      %v831 = vperm.slane %v146, 3
      %v836 = vadd.f32 %v765, %v828
      %v837 = vadd.f32 %v785, %v829
      %v838 = vadd.f32 %v805, %v830
      %v839 = vadd.f32 %v825, %v831
      %v840 = vxor.u32 %v836, 2147483648
      %v841 = vmul.f32 %v840, 1.442695
      %v842 = vpow.pop %v841
      %v843 = vadd.f32 %v842, 1.0
      %v844 = vrcp.pop %v843
      %v845 = vmul.f32 %v843, %v844
      %v846 = vsub.f32 1.0, %v845
      %v847 = vmul.f32 %v844, %v846
      %v848 = vadd.f32 %v844, %v847
      %vm849 = vweird.f32 %v843
      %vm850 = vweird.f32 %v844
      %vm851 = vmor %vm849, %vm850
      %v852 = vsel %vm851, %v844, %v848
      %v853 = vand.u32 2147483647, %v843
      %vm854 = vcmp.eq.f32.partialorder %v853, 8.507059e+37
      %v855 = vand.u32 %v843, 2147483648
      %v856 = vor.u32 1.1754944e-38, %v855
      %v857 = vsel %vm854, %v856, %v852
      %v858 = vmul.f32 1.0, %v857
      %v859 = vxor.u32 %v837, 2147483648
      %v860 = vmul.f32 %v859, 1.442695
      %v861 = vpow.pop %v860
      %v862 = vadd.f32 %v861, 1.0
      %v863 = vrcp.pop %v862
      %v864 = vmul.f32 %v862, %v863
      %v865 = vsub.f32 1.0, %v864
      %v866 = vmul.f32 %v863, %v865
      %v867 = vadd.f32 %v863, %v866
      %vm868 = vweird.f32 %v862
      %vm869 = vweird.f32 %v863
      %vm870 = vmor %vm868, %vm869
      %v871 = vsel %vm870, %v863, %v867
      %v872 = vand.u32 2147483647, %v862
      %vm873 = vcmp.eq.f32.partialorder %v872, 8.507059e+37
      %v874 = vand.u32 %v862, 2147483648
      %v875 = vor.u32 1.1754944e-38, %v874
      %v876 = vsel %vm873, %v875, %v871
      %v877 = vmul.f32 1.0, %v876
      %v878 = vtanh.pop %v838
      %v879 = vxor.u32 %v839, 2147483648
      %v880 = vmul.f32 %v879, 1.442695
      %v881 = vpow.pop %v880
      %v882 = vadd.f32 %v881, 1.0
      %v883 = vrcp.pop %v882
      %v884 = vmul.f32 %v882, %v883
      %v885 = vsub.f32 1.0, %v884
      %v886 = vmul.f32 %v883, %v885
      %v887 = vadd.f32 %v883, %v886
      %vm888 = vweird.f32 %v882
      %vm889 = vweird.f32 %v883
      %vm890 = vmor %vm888, %vm889
      %v891 = vsel %vm890, %v883, %v887
      %v892 = vand.u32 2147483647, %v882
      %vm893 = vcmp.eq.f32.partialorder %v892, 8.507059e+37
      %v894 = vand.u32 %v882, 2147483648
      %v895 = vor.u32 1.1754944e-38, %v894
      %v896 = vsel %vm893, %v895, %v891
      %v897 = vmul.f32 1.0, %v896
      %v898 = vmul.f32 %v877, %v538
      %v899 = vmul.f32 %v858, %v878
      %v900 = vadd.f32 %v898, %v899
      %v901 = vtanh.pop %v900
      %v902 = vmul.f32 %v897, %v901
      %v903 = vld [vmem:[#allocation16] sm:$0xff]
      %v904 = vld [vmem:[#allocation16 + $0x8] sm:$0xff]
      %v905 = vld [vmem:[#allocation16 + $0x10] sm:$0xff]
      %v906 = vld [vmem:[#allocation16 + $0x18] sm:$0xff]
      %v907 = vld [vmem:[#allocation16 + $0x20] sm:$0xff]
      %v908 = vld [vmem:[#allocation16 + $0x28] sm:$0xff]
      %v909 = vld [vmem:[#allocation16 + $0x30] sm:$0xff]
      %v910 = vld [vmem:[#allocation16 + $0x38] sm:$0xff]
      %v911 = vld [vmem:[#allocation16 + $0x40] sm:$0xff]
      %v912 = vld [vmem:[#allocation16 + $0x48] sm:$0xff]
      %v913 = vld [vmem:[#allocation16 + $0x50] sm:$0xff]
      %v914 = vld [vmem:[#allocation16 + $0x58] sm:$0xff]
      %v915 = vld [vmem:[#allocation16 + $0x60] sm:$0xff]
      %v916 = vld [vmem:[#allocation16 + $0x68] sm:$0xff]
      %v917 = vld [vmem:[#allocation16 + $0x70] sm:$0xff]
      %v918 = vld [vmem:[#allocation16 + $0x78] sm:$0xff]
      %v920 = vperm.slane %v147, 0
      %922 = vmatpush.msra.mxu0 %v918
      %923 = vmatpush.msra.mxu0 %v917
      %924 = vmatpush.msra.mxu0 %v916
      %925 = vmatpush.msra.mxu0 %v915
      %926 = vmatpush.msra.mxu0 %v914
      %927 = vmatpush.msra.mxu0 %v913
      %928 = vmatpush.msra.mxu0 %v912
      %929 = vmatpush.msra.mxu0 %v911
      %930 = vmatpush.msra.mxu0 %v910
      %931 = vmatpush.msra.mxu0 %v909
      %932 = vmatpush.msra.mxu0 %v908
      %933 = vmatpush.msra.mxu0 %v907
      %934 = vmatpush.msra.mxu0 %v906
      %935 = vmatpush.msra.mxu0 %v905
      %936 = vmatpush.msra.mxu0 %v904
      %937 = vmatpush.msra.mxu0 %v903
      %938 = vmatmul.f32.gmra.mxu0 %v902
      %v939 = vpop.f32.mrf.mxu0
      %v940 = vadd.f32 %v920, %v939
      %941 = vdwg.mxu0
      %s942 = smul.u32 %s531, 8
      %s943 = scalar_lea.vmem [#allocation18], %s942
      %944 = vst [vmem:[%s943] sm:$0xff] %v940
      %945 = vst [vmem:[#allocation2] sm:$0xff] %v902
      %946 = vst [vmem:[#allocation3] sm:$0xff] %v900
      %s947 = sld [smem:[#allocation6 + %s531]]
      %p948 = scmp.eq.s32.totalorder %s947, 1
      // Predicated region
      $region84: #{_forward_padded.1} parent=80 // pred_check
        %p949 = pneg %p948
      $region85: #{_forward_padded.1} parent=80 // pred_check_branch
        %951 = sbr.rel (%p949) target = $region87
      $region86: #{_forward_padded.1} parent=80 // pred_region
        %s952 = scalar_lea.vmem %s2, %s942
        %v953 = vld [vmem:[%s952] sm:$0xff]
        %954 = vset.pattern.permute.xlu0 0
        %955 = vperm.xlu0 %954, %v953
        %v956 = vpop.permute.xlu0 %955
        %vm957 = vcmp.eq.s32.totalorder %v143, %v956
        %v958 = vsel %vm957, 1, 0
        %v959 = vcvt.s32.f32 %v958
        %v960 = vld [vmem:[#allocation12] sm:$0xff]
        %v961 = vld [vmem:[#allocation12 + $0x8] sm:$0xff]
        %v962 = vld [vmem:[#allocation12 + $0x10] sm:$0xff]
        %v963 = vld [vmem:[#allocation12 + $0x18] sm:$0xff]
        %v964 = vld [vmem:[#allocation12 + $0x20] sm:$0xff]
        %v965 = vld [vmem:[#allocation12 + $0x28] sm:$0xff]
        %v966 = vld [vmem:[#allocation12 + $0x30] sm:$0xff]
        %v967 = vld [vmem:[#allocation12 + $0x38] sm:$0xff]
        %v968 = vld [vmem:[#allocation12 + $0x40] sm:$0xff]
        %v969 = vld [vmem:[#allocation12 + $0x48] sm:$0xff]
        %v970 = vld [vmem:[#allocation12 + $0x50] sm:$0xff]
        %v971 = vld [vmem:[#allocation12 + $0x58] sm:$0xff]
        %v972 = vld [vmem:[#allocation12 + $0x60] sm:$0xff]
        %v973 = vld [vmem:[#allocation12 + $0x68] sm:$0xff]
        %v974 = vld [vmem:[#allocation12 + $0x70] sm:$0xff]
        %v975 = vld [vmem:[#allocation12 + $0x78] sm:$0xff]
        %976 = vmatpush.msra.mxu0 %v975
        %977 = vmatpush.msra.mxu0 %v974
        %978 = vmatpush.msra.mxu0 %v973
        %979 = vmatpush.msra.mxu0 %v972
        %980 = vmatpush.msra.mxu0 %v971
        %981 = vmatpush.msra.mxu0 %v970
        %982 = vmatpush.msra.mxu0 %v969
        %983 = vmatpush.msra.mxu0 %v968
        %984 = vmatpush.msra.mxu0 %v967
        %985 = vmatpush.msra.mxu0 %v966
        %986 = vmatpush.msra.mxu0 %v965
        %987 = vmatpush.msra.mxu0 %v964
        %988 = vmatpush.msra.mxu0 %v963
        %989 = vmatpush.msra.mxu0 %v962
        %990 = vmatpush.msra.mxu0 %v961
        %991 = vmatpush.msra.mxu0 %v960
        %992 = vmatmul.f32.gmra.mxu0 %v959
        %v993 = vpop.f32.mrf.mxu0
        %v994 = vadd.f32 0.0, %v993
        %995 = vdwg.mxu0
        %996 = vst [vmem:[#allocation4] sm:$0xff] %v994
      $region87: #{_forward_padded.1} parent=80 // pred_fallthru
        _
      %p997 = scmp.eq.s32.totalorder %s947, 0
      // Predicated region
      $region88: #{_forward_padded.1} parent=80 // pred_check
        %p998 = pneg %p997
      $region89: #{_forward_padded.1} parent=80 // pred_check_branch
        %1000 = sbr.rel (%p998) target = $region91
      $region90: #{_forward_padded.1} parent=80 // pred_region
        %1001 = vmax.xlane.f32.xlu0 %v940
        %v1002 = vpop.xlane.xlu0 %1001
        %vm1003 = vcmp.eq.f32.partialorder %v940, %v1002
        %v1004 = vsel %vm1003, %v144, 128.0
        %1005 = vmin.xlane.f32.xlu0 %v1004
        %v1006 = vpop.xlane.xlu0 %1005
        %vm1007 = vcmp.eq.f32.partialorder %v144, %v1006
        %v1008 = vsel %vm1007, 1, 0
        %v1009 = vcvt.s32.f32 %v1008
        %v1010 = vld [vmem:[#allocation12] sm:$0xff]
        %v1011 = vld [vmem:[#allocation12 + $0x8] sm:$0xff]
        %v1012 = vld [vmem:[#allocation12 + $0x10] sm:$0xff]
        %v1013 = vld [vmem:[#allocation12 + $0x18] sm:$0xff]
        %v1014 = vld [vmem:[#allocation12 + $0x20] sm:$0xff]
        %v1015 = vld [vmem:[#allocation12 + $0x28] sm:$0xff]
        %v1016 = vld [vmem:[#allocation12 + $0x30] sm:$0xff]
        %v1017 = vld [vmem:[#allocation12 + $0x38] sm:$0xff]
        %v1018 = vld [vmem:[#allocation12 + $0x40] sm:$0xff]
        %v1019 = vld [vmem:[#allocation12 + $0x48] sm:$0xff]
        %v1020 = vld [vmem:[#allocation12 + $0x50] sm:$0xff]
        %v1021 = vld [vmem:[#allocation12 + $0x58] sm:$0xff]
        %v1022 = vld [vmem:[#allocation12 + $0x60] sm:$0xff]
        %v1023 = vld [vmem:[#allocation12 + $0x68] sm:$0xff]
        %v1024 = vld [vmem:[#allocation12 + $0x70] sm:$0xff]
        %v1025 = vld [vmem:[#allocation12 + $0x78] sm:$0xff]
        %1026 = vmatpush.msra.mxu0 %v1025
        %1027 = vmatpush.msra.mxu0 %v1024
        %1028 = vmatpush.msra.mxu0 %v1023
        %1029 = vmatpush.msra.mxu0 %v1022
        %1030 = vmatpush.msra.mxu0 %v1021
        %1031 = vmatpush.msra.mxu0 %v1020
        %1032 = vmatpush.msra.mxu0 %v1019
        %1033 = vmatpush.msra.mxu0 %v1018
        %1034 = vmatpush.msra.mxu0 %v1017
        %1035 = vmatpush.msra.mxu0 %v1016
        %1036 = vmatpush.msra.mxu0 %v1015
        %1037 = vmatpush.msra.mxu0 %v1014
        %1038 = vmatpush.msra.mxu0 %v1013
        %1039 = vmatpush.msra.mxu0 %v1012
        %1040 = vmatpush.msra.mxu0 %v1011
        %1041 = vmatpush.msra.mxu0 %v1010
        %1042 = vmatmul.f32.gmra.mxu0 %v1009
        %v1043 = vpop.f32.mrf.mxu0
        %v1044 = vadd.f32 0.0, %v1043
        %1045 = vdwg.mxu0
        %1046 = vst [vmem:[#allocation4] sm:$0xff] %v1044
      $region91: #{_forward_padded.1} parent=80 // pred_fallthru
        _
    $region81: #{_forward_padded.1} parent=1 // loop_footer
      %s535 = sadd.s32 1, %s531
    $region82: #{_forward_padded.1} parent=1 // loop_footer_branch
      %530 = sbr.rel target = $region78
    $region83: #{_forward_padded.1} parent=1 // loop_exit
      _
    // Predicated region
    $region92: #{_forward_padded.1} parent=1 // pred_check
      _
    $region93: #{_forward_padded.1} parent=1 // pred_check_branch
      %1048 = sbr.rel (0) target = $region95
    $region94: #{_forward_padded.1} parent=1 // pred_region
      %1050 = vsyncadd [#allocation9], 0
      %s1051 = sshll.u32 [#allocation18], 4
      %s1052 = int_to_ptr.vmem [resolvable:$true] %s1051
      %s1053 = sshll.u32 %s12, 4
      %s1054 = int_to_ptr.hbm [resolvable:$true] %s1053
      %1059 = dma.vmem_to_hbm [thread:$0]  %s1052, 1024, %s1054, [#allocation9], 128, 128, 8
    $region95: #{_forward_padded.1} parent=1 // pred_fallthru
      _
    // Predicated region
    $region96: #{_forward_padded.1} parent=1 // pred_check
      _
    $region97: #{_forward_padded.1} parent=1 // pred_check_branch
      %1061 = sbr.rel (0) target = $region99
    $region98: #{_forward_padded.1} parent=1 // pred_region
      %1063 = dma.done [#allocation9], 1024
    $region99: #{_forward_padded.1} parent=1 // pred_fallthru
      _
    %1064 = vsyncpa [#allocation8], 1
    %1065 = vsyncpa [#allocation11], 1
    %1066 = vsyncpa [#allocation14], 1
    %1067 = vsyncpa [#allocation17], 1
    %1068 = vsyncpa [#allocation9], 1

</llo_original>
